<compile_context>
chip_gen: v5e
topology: v5e:2x2
jax: 0.10.0
libtpu: 0.0.40
codegen_flags: <defaults>
</compile_context>

<pallas_src>
import jax
import jax.numpy as jnp
from jax.experimental import pallas as pl
from jax.experimental.pallas import tpu as pltpu


# ----------------------------------------------------------------------------
# Kernel: NB batch elements per grid step (rows = NB*H), everything fused.
# ----------------------------------------------------------------------------
def _decoder_block_kernel(xf_ref, sf_ref, uh_ref, wgu_ref,
                          bdws_ref, bgs_ref, bdwo_ref, bo_ref,
                          sdn_ref, sup_ref,
                          bw1x_ref, bw1a_ref, b1_ref, bw2_ref, b2_ref,
                          o_ref):
    """Shapes (M = NB*H rows, W0C = W0*Cin, WCo = W*Cout):

    xf_ref  : (NB*H0, W0C)    input x, batch-flattened, row-flattened NHWC
    sf_ref  : (M, WCo)        skip s, batch-flattened, row-flattened NHWC
    uh_ref  : (M, NB*H0)      kron(I_NB, Uh)  bilinear H-interpolation
    wgu_ref : (W0C, WCo)      UWK @ kron(I_W, Wg)  (W-upsample + 1x1 Wg folded)
    bdws_ref: (WCo, WCo)      kron(I_W, Ws)
    bgs_ref : (1, WCo)        bg + bs, tiled per pixel column
    bdwo_ref: (WCo, WCo)      kron(I_W, Wout)
    bo_ref  : (1, WCo)
    sdn_ref : (M, M)          kron(I_NB, row-shift h<-h-1, zero fill)
    sup_ref : (M, M)          kron(I_NB, row-shift h<-h+1, zero fill)
    bw1x_ref: (3, W0C, WCo)   UWK @ banded 3x3 conv1 weights, x-channel group
    bw1a_ref: (3, WCo, WCo)   banded 3x3 conv1 weights, attention group
    b1_ref  : (1, WCo)
    bw2_ref : (3, WCo, WCo)   banded 3x3 conv2 weights
    b2_ref  : (1, WCo)
    o_ref   : (M, WCo)        output, lane dense
    """
    def mm(a, b):
        return jax.lax.dot_general(a, b, (((1,), (0,)), ((), ())),
                                   preferred_element_type=jnp.float32)

    # ---- bilinear x2 upsample: only the H direction is materialised --------
    xh = mm(uh_ref[...], xf_ref[...])                    # (M, W0C)

    # ---- attention gate (1x1 convs as block-diag matmuls) ------------------
    g = mm(xh, wgu_ref[...])                             # Wg(up(x)), W-upsample folded
    sk = mm(sf_ref[...], bdws_ref[...])                  # Ws(s)
    r = jnp.maximum(g + sk + bgs_ref[...], 0.0)          # ReLU (folded biases)
    z = mm(r, bdwo_ref[...]) + bo_ref[...]               # output 1x1 conv
    att = 1.0 / (1.0 + jnp.exp(-z))                      # Sigmoid

    sdn = sdn_ref[...]
    sup = sup_ref[...]

    def conv3x3(x, bw_ref, acc):
        # rows of x shifted with zero fill: dh=0 -> x[h-1], dh=1 -> x[h],
        # dh=2 -> x[h+1]; W direction (incl. 'same' zero padding) lives in bw_ref.
        acc = acc + mm(mm(sdn, x), bw_ref[0])
        acc = acc + mm(x, bw_ref[1])
        acc = acc + mm(mm(sup, x), bw_ref[2])
        return acc

    # ---- conv1 over concat([up(x), att]) as two channel groups + ReLU ------
    acc1 = jnp.broadcast_to(b1_ref[...], o_ref.shape)    # bias-init accumulator
    acc1 = conv3x3(xh, bw1x_ref, acc1)                   # W-upsample folded into weights
    acc1 = conv3x3(att, bw1a_ref, acc1)
    y1 = jnp.maximum(acc1, 0.0)

    # ---- conv2 + ReLU -------------------------------------------------------
    acc2 = jnp.broadcast_to(b2_ref[...], o_ref.shape)
    acc2 = conv3x3(y1, bw2_ref, acc2)
    o_ref[...] = jnp.maximum(acc2, 0.0)


# ----------------------------------------------------------------------------
# Host-side helpers (weight preprocessing, runs under jit, tiny).
# ----------------------------------------------------------------------------
def _bilinear_matrix(n_in, n_out):
    """(n_out, n_in) interpolation matrix for bilinear x2, align_corners=True."""
    i = jnp.arange(n_out, dtype=jnp.float32)
    src = i * (n_in - 1) / (n_out - 1)
    i0f = jnp.floor(src)
    frac = src - i0f
    i0 = i0f.astype(jnp.int32)
    i1 = jnp.minimum(i0 + 1, n_in - 1)
    m = jnp.zeros((n_out, n_in), jnp.float32)
    rows = jnp.arange(n_out)
    m = m.at[rows, i0].add(1.0 - frac)
    m = m.at[rows, i1].add(frac)
    return m


def _banded_conv_weights(w_hwio, W):
    """(3,3,Ci,Co) HWIO -> (3, W*Ci, W*Co) banded block-Toeplitz matrices.

    BW[dh][wc*Ci+ci, w*Co+co] = w[dh, wc-w+1, ci, co] (zero outside the band):
    the W direction of a 3x3 'same' conv (zero padded) as one matmul per dh.
    """
    mats = []
    for dh in range(3):
        m = None
        for dw in range(3):
            band = jnp.eye(W, W, k=1 - dw, dtype=jnp.float32)    # wc == w + dw - 1
            term = jnp.kron(band, w_hwio[dh, dw])
            m = term if m is None else m + term
        mats.append(m)
    return jnp.stack(mats, axis=0)


def _pick_batch_tile(n, h):
    """Largest divisor of n keeping the per-step row count modest."""
    nb = 1
    for cand in range(1, n + 1):
        if n % cand == 0 and cand * h <= 256:
            nb = cand
    return nb


@jax.jit
def decoder_block_forward(x_nchw, s_nchw, params):
    """Decoder_block forward. x: (N, in_c, H0, W0), s: (N, out_c, 2H0, 2W0) NCHW."""
    N, Cin, H0, W0 = x_nchw.shape
    _, Cout, H, W = s_nchw.shape

    f32 = jnp.float32
    hp = jax.lax.Precision.HIGHEST
    W0C = W0 * Cin
    WCo = W * Cout
    NB = _pick_batch_tile(N, H)
    M = NB * H

    # NCHW -> batch+row flattened NHWC: (N*H, W*C)
    xf = jnp.transpose(x_nchw, (0, 2, 3, 1)).reshape(N * H0, W0C).astype(f32)
    sf = jnp.transpose(s_nchw, (0, 2, 3, 1)).reshape(N * H, WCo).astype(f32)

    # Upsample matrices (H direction block-diag over the NB-batch tile).
    Uh = _bilinear_matrix(H0, H)                                     # (H, H0)
    Uw = _bilinear_matrix(W0, W)                                     # (W, W0)
    eyeNB = jnp.eye(NB, dtype=f32)
    UhB = jnp.kron(eyeNB, Uh)                                        # (M, NB*H0)
    UWK = jnp.kron(Uw.T, jnp.eye(Cin, dtype=f32))                    # (W0*Cin, W*Cin)

    # Attention-gate 1x1 convs as block-diagonal matmuls; W-upsample folded into Wg.
    eyeW = jnp.eye(W, dtype=f32)
    BDWg = jnp.kron(eyeW, params["wg"])                              # (W*Cin, W*Cout)
    WgU = jnp.matmul(UWK, BDWg, precision=hp)                        # (W0*Cin, W*Cout)
    BDWs = jnp.kron(eyeW, params["ws"])                              # (WCo, WCo)
    BDWo = jnp.kron(eyeW, params["wo"])
    bgs = (jnp.tile(params["bg"], W) + jnp.tile(params["bs"], W))[None, :]
    bo = jnp.tile(params["bo"], W)[None, :]

    # Row-shift matrices (zero-filled 'same' padding in H), block-diag over batch tile.
    SdnB = jnp.kron(eyeNB, jnp.eye(H, H, k=-1, dtype=f32))           # row h <- h-1
    SupB = jnp.kron(eyeNB, jnp.eye(H, H, k=1, dtype=f32))            # row h <- h+1

    # Banded 3x3 conv weights; conv1 split into the two concat channel groups,
    # with the W-direction upsample folded into the x group.
    w1 = params["w1"]                                                # (3,3,Cin+Cout,Cout)
    BW1x = jnp.einsum("ab,kbc->kac", UWK,
                      _banded_conv_weights(w1[:, :, :Cin, :], W),
                      precision=hp)                                  # (3, W0*Cin, WCo)
    BW1a = _banded_conv_weights(w1[:, :, Cin:, :], W)                # (3, WCo, WCo)
    BW2 = _banded_conv_weights(params["w2"], W)                      # (3, WCo, WCo)
    b1 = jnp.tile(params["b1"], W)[None, :]
    b2 = jnp.tile(params["b2"], W)[None, :]

    grid_spec = pltpu.PrefetchScalarGridSpec(
        num_scalar_prefetch=0,
        grid=(N // NB,),
        in_specs=[
            pl.BlockSpec((NB * H0, W0C), lambda n: (n, 0)),          # xf
            pl.BlockSpec((M, WCo), lambda n: (n, 0)),                # sf
            pl.BlockSpec((M, NB * H0), lambda n: (0, 0)),            # UhB
            pl.BlockSpec((W0C, WCo), lambda n: (0, 0)),              # WgU
            pl.BlockSpec((WCo, WCo), lambda n: (0, 0)),              # BDWs
            pl.BlockSpec((1, WCo), lambda n: (0, 0)),                # bgs
            pl.BlockSpec((WCo, WCo), lambda n: (0, 0)),              # BDWo
            pl.BlockSpec((1, WCo), lambda n: (0, 0)),                # bo
            pl.BlockSpec((M, M), lambda n: (0, 0)),                  # SdnB
            pl.BlockSpec((M, M), lambda n: (0, 0)),                  # SupB
            pl.BlockSpec((3, W0C, WCo), lambda n: (0, 0, 0)),        # BW1x
            pl.BlockSpec((3, WCo, WCo), lambda n: (0, 0, 0)),        # BW1a
            pl.BlockSpec((1, WCo), lambda n: (0, 0)),                # b1
            pl.BlockSpec((3, WCo, WCo), lambda n: (0, 0, 0)),        # BW2
            pl.BlockSpec((1, WCo), lambda n: (0, 0)),                # b2
        ],
        out_specs=pl.BlockSpec((M, WCo), lambda n: (n, 0)),
    )

    out_flat = pl.pallas_call(
        _decoder_block_kernel,
        out_shape=jax.ShapeDtypeStruct((N * H, WCo), f32),
        grid_spec=grid_spec,
        compiler_params=pltpu.CompilerParams(
            dimension_semantics=("parallel",),
            vmem_limit_bytes=32 * 1024 * 1024),
    )(xf, sf, UhB, WgU, BDWs, bgs, BDWo, bo, SdnB, SupB,
      BW1x, BW1a, b1, BW2, b2)

    # (N*H, W*Cout) -> NCHW
    return jnp.transpose(out_flat.reshape(N, H, W, Cout), (0, 3, 1, 2))


# ----------------------------------------------------------------------------
# Parameter init matching PyTorch Conv2d defaults (uniform +-1/sqrt(fan_in)).
# ----------------------------------------------------------------------------
def init_decoder_params(key, in_c, out_c):
    ks = jax.random.split(key, 10)

    def u(k, shape, fan_in):
        b = 1.0 / jnp.sqrt(float(fan_in))
        return jax.random.uniform(k, shape, jnp.float32, -b, b)

    cc = in_c + out_c
    return {
        "wg": u(ks[0], (in_c, out_c), in_c),          # 1x1 conv as (Cin, Cout)
        "bg": u(ks[1], (out_c,), in_c),
        "ws": u(ks[2], (out_c, out_c), out_c),
        "bs": u(ks[3], (out_c,), out_c),
        "wo": u(ks[4], (out_c, out_c), out_c),
        "bo": u(ks[5], (out_c,), out_c),
        "w1": u(ks[6], (3, 3, cc, out_c), cc * 9),    # HWIO
        "b1": u(ks[7], (out_c,), cc * 9),
        "w2": u(ks[8], (3, 3, out_c, out_c), out_c * 9),
        "b2": u(ks[9], (out_c,), out_c * 9),
    }


# ----------------------------------------------------------------------------
# Pure-JAX reference (independent formulation) for correctness check.
# ----------------------------------------------------------------------------
def ref_forward(x, s, p):
    N, Cin, H0, W0 = x.shape
    H, W = 2 * H0, 2 * W0
    hp = jax.lax.Precision.HIGHEST

    def upsample(v):  # bilinear x2, align_corners=True (gather-based)
        hs = jnp.arange(H, dtype=jnp.float32) * (H0 - 1) / (H - 1)
        ws = jnp.arange(W, dtype=jnp.float32) * (W0 - 1) / (W - 1)
        h0 = jnp.floor(hs).astype(jnp.int32)
        w0 = jnp.floor(ws).astype(jnp.int32)
        h1 = jnp.minimum(h0 + 1, H0 - 1)
        w1 = jnp.minimum(w0 + 1, W0 - 1)
        fh = (hs - h0.astype(jnp.float32))[:, None]
        fw = (ws - w0.astype(jnp.float32))[None, :]
        v00 = v[:, :, h0][:, :, :, w0]
        v01 = v[:, :, h0][:, :, :, w1]
        v10 = v[:, :, h1][:, :, :, w0]
        v11 = v[:, :, h1][:, :, :, w1]
        top = v00 * (1 - fw) + v01 * fw
        bot = v10 * (1 - fw) + v11 * fw
        return top * (1 - fh) + bot * fh

    def conv1x1(v, w, b):
        y = jnp.einsum("nchw,cd->ndhw", v, w, precision=hp)
        return y + b[None, :, None, None]

    def conv3x3(v, w_hwio, b):
        w_oihw = jnp.transpose(w_hwio, (3, 2, 0, 1))
        y = jax.lax.conv_general_dilated(
            v, w_oihw, window_strides=(1, 1), padding="SAME",
            dimension_numbers=("NCHW", "OIHW", "NCHW"), precision=hp)
        return jnp.maximum(y + b[None, :, None, None], 0.0)

    xu = upsample(x)
    g = conv1x1(xu, p["wg"], p["bg"])
    sk = conv1x1(s, p["ws"], p["bs"])
    att = jax.nn.sigmoid(conv1x1(jnp.maximum(g + sk, 0.0), p["wo"], p["bo"]))
    z = jnp.concatenate([xu, att], axis=1)
    y1 = conv3x3(z, p["w1"], p["b1"])
    return conv3x3(y1, p["w2"], p["b2"])


if __name__ == "__main__":
    key = jax.random.PRNGKey(0)
    kx, ks, kp = jax.random.split(key, 3)

    N, in_c, out_c, H0, W0 = 2, 4, 8, 8, 8        # spatial after upsample: 16x16
    x = jax.random.normal(kx, (N, in_c, H0, W0), jnp.float32)
    s = jax.random.normal(ks, (N, out_c, 2 * H0, 2 * W0), jnp.float32)
    params = init_decoder_params(kp, in_c, out_c)

    out = jax.block_until_ready(decoder_block_forward(x, s, params))
    assert out.shape == (N, out_c, 2 * H0, 2 * W0), out.shape

    ref = jax.block_until_ready(ref_forward(x, s, params))
    err = float(jnp.max(jnp.abs(out - ref)))
    assert jnp.allclose(out, ref, atol=2e-3, rtol=2e-3), err

    print("KERNEL_OK")
</pallas_src>

<mosaic_0001>
module attributes {stable_mosaic.version = 11 : i64} {
  func.func @_decoder_block_kernel(%arg0: i32, %arg1: memref<16x32xf32, #tpu.memory_space<vmem>>, %arg2: memref<32x128xf32, #tpu.memory_space<vmem>>, %arg3: memref<32x16xf32, #tpu.memory_space<vmem>>, %arg4: memref<32x128xf32, #tpu.memory_space<vmem>>, %arg5: memref<128x128xf32, #tpu.memory_space<vmem>>, %arg6: memref<1x128xf32, #tpu.memory_space<vmem>>, %arg7: memref<128x128xf32, #tpu.memory_space<vmem>>, %arg8: memref<1x128xf32, #tpu.memory_space<vmem>>, %arg9: memref<32x32xf32, #tpu.memory_space<vmem>>, %arg10: memref<32x32xf32, #tpu.memory_space<vmem>>, %arg11: memref<3x32x128xf32, #tpu.memory_space<vmem>>, %arg12: memref<3x128x128xf32, #tpu.memory_space<vmem>>, %arg13: memref<1x128xf32, #tpu.memory_space<vmem>>, %arg14: memref<3x128x128xf32, #tpu.memory_space<vmem>>, %arg15: memref<1x128xf32, #tpu.memory_space<vmem>>, %arg16: memref<32x128xf32, #tpu.memory_space<vmem>>) attributes {dimension_semantics = [#tpu.dimension_semantics<parallel>], iteration_bounds = array<i64: 1>, scalar_prefetch = 0 : i64, scratch_operands = 0 : i64, tpu.core_type = #tpu.core_type<tc>, window_params = [{transform_indices = @transform_0, window_bounds = array<i64: 16, 32>}, {transform_indices = @transform_1, window_bounds = array<i64: 32, 128>}, {pipeline_mode = #tpu.pipeline_mode<synchronous>, transform_indices = @transform_2, window_bounds = array<i64: 32, 16>}, {pipeline_mode = #tpu.pipeline_mode<synchronous>, transform_indices = @transform_3, window_bounds = array<i64: 32, 128>}, {pipeline_mode = #tpu.pipeline_mode<synchronous>, transform_indices = @transform_4, window_bounds = array<i64: 128, 128>}, {pipeline_mode = #tpu.pipeline_mode<synchronous>, transform_indices = @transform_5, window_bounds = array<i64: 1, 128>}, {pipeline_mode = #tpu.pipeline_mode<synchronous>, transform_indices = @transform_6, window_bounds = array<i64: 128, 128>}, {pipeline_mode = #tpu.pipeline_mode<synchronous>, transform_indices = @transform_7, window_bounds = array<i64: 1, 128>}, {pipeline_mode = #tpu.pipeline_mode<synchronous>, transform_indices = @transform_8, window_bounds = array<i64: 32, 32>}, {pipeline_mode = #tpu.pipeline_mode<synchronous>, transform_indices = @transform_9, window_bounds = array<i64: 32, 32>}, {pipeline_mode = #tpu.pipeline_mode<synchronous>, transform_indices = @transform_10, window_bounds = array<i64: 3, 32, 128>}, {pipeline_mode = #tpu.pipeline_mode<synchronous>, transform_indices = @transform_11, window_bounds = array<i64: 3, 128, 128>}, {pipeline_mode = #tpu.pipeline_mode<synchronous>, transform_indices = @transform_12, window_bounds = array<i64: 1, 128>}, {pipeline_mode = #tpu.pipeline_mode<synchronous>, transform_indices = @transform_13, window_bounds = array<i64: 3, 128, 128>}, {pipeline_mode = #tpu.pipeline_mode<synchronous>, transform_indices = @transform_14, window_bounds = array<i64: 1, 128>}, {transform_indices = @transform_15, window_bounds = array<i64: 32, 128>}]} {
    %c0 = arith.constant 0 : index
    %c0_0 = arith.constant 0 : index
    %0 = vector.load %arg3[%c0, %c0_0] : memref<32x16xf32, #tpu.memory_space<vmem>>, vector<32x16xf32>
    %c0_1 = arith.constant 0 : index
    %c0_2 = arith.constant 0 : index
    %1 = vector.load %arg1[%c0_1, %c0_2] : memref<16x32xf32, #tpu.memory_space<vmem>>, vector<16x32xf32>
    %cst = arith.constant dense<0.000000e+00> : vector<32x32xf32>
    %2 = tpu.matmul %0, %1, %cst {dimension_numbers = #tpu.dot_dimension_numbers<[1], [0], [0], [1], [0, 0, 1, 1], [], []>} : vector<32x16xf32>, vector<16x32xf32>, vector<32x32xf32> -> vector<32x32xf32>
    %c0_3 = arith.constant 0 : index
    %c0_4 = arith.constant 0 : index
    %3 = vector.load %arg4[%c0_3, %c0_4] : memref<32x128xf32, #tpu.memory_space<vmem>>, vector<32x128xf32>
    %cst_5 = arith.constant dense<0.000000e+00> : vector<32x128xf32>
    %4 = tpu.matmul %2, %3, %cst_5 {dimension_numbers = #tpu.dot_dimension_numbers<[1], [0], [0], [1], [0, 0, 1, 1], [], []>} : vector<32x32xf32>, vector<32x128xf32>, vector<32x128xf32> -> vector<32x128xf32>
    %c0_6 = arith.constant 0 : index
    %c0_7 = arith.constant 0 : index
    %5 = vector.load %arg2[%c0_6, %c0_7] : memref<32x128xf32, #tpu.memory_space<vmem>>, vector<32x128xf32>
    %c0_8 = arith.constant 0 : index
    %c0_9 = arith.constant 0 : index
    %6 = vector.load %arg5[%c0_8, %c0_9] : memref<128x128xf32, #tpu.memory_space<vmem>>, vector<128x128xf32>
    %cst_10 = arith.constant dense<0.000000e+00> : vector<32x128xf32>
    %7 = tpu.matmul %5, %6, %cst_10 {dimension_numbers = #tpu.dot_dimension_numbers<[1], [0], [0], [1], [0, 0, 1, 1], [], []>} : vector<32x128xf32>, vector<128x128xf32>, vector<32x128xf32> -> vector<32x128xf32>
    %8 = arith.addf %4, %7 : vector<32x128xf32>
    %c0_11 = arith.constant 0 : index
    %c0_12 = arith.constant 0 : index
    %9 = vector.load %arg6[%c0_11, %c0_12] : memref<1x128xf32, #tpu.memory_space<vmem>>, vector<1x128xf32>
    %10 = vector.broadcast %9 : vector<1x128xf32> to vector<32x128xf32>
    %11 = arith.addf %8, %10 : vector<32x128xf32>
    %cst_13 = arith.constant 0.000000e+00 : f32
    %12 = vector.broadcast %cst_13 : f32 to vector<32x128xf32>
    %13 = arith.maximumf %11, %12 : vector<32x128xf32>
    %c0_14 = arith.constant 0 : index
    %c0_15 = arith.constant 0 : index
    %14 = vector.load %arg7[%c0_14, %c0_15] : memref<128x128xf32, #tpu.memory_space<vmem>>, vector<128x128xf32>
    %cst_16 = arith.constant dense<0.000000e+00> : vector<32x128xf32>
    %15 = tpu.matmul %13, %14, %cst_16 {dimension_numbers = #tpu.dot_dimension_numbers<[1], [0], [0], [1], [0, 0, 1, 1], [], []>} : vector<32x128xf32>, vector<128x128xf32>, vector<32x128xf32> -> vector<32x128xf32>
    %c0_17 = arith.constant 0 : index
    %c0_18 = arith.constant 0 : index
    %16 = vector.load %arg8[%c0_17, %c0_18] : memref<1x128xf32, #tpu.memory_space<vmem>>, vector<1x128xf32>
    %17 = vector.broadcast %16 : vector<1x128xf32> to vector<32x128xf32>
    %18 = arith.addf %15, %17 : vector<32x128xf32>
    %cst_19 = arith.constant 0.000000e+00 : f32
    %19 = vector.broadcast %cst_19 : f32 to vector<32x128xf32>
    %20 = arith.subf %19, %18 : vector<32x128xf32>
    %21 = math.exp %20 : vector<32x128xf32>
    %cst_20 = arith.constant 1.000000e+00 : f32
    %22 = vector.broadcast %cst_20 : f32 to vector<32x128xf32>
    %23 = arith.addf %22, %21 : vector<32x128xf32>
    %cst_21 = arith.constant 1.000000e+00 : f32
    %24 = vector.broadcast %cst_21 : f32 to vector<32x128xf32>
    %25 = arith.divf %24, %23 : vector<32x128xf32>
    %c0_22 = arith.constant 0 : index
    %c0_23 = arith.constant 0 : index
    %26 = vector.load %arg9[%c0_22, %c0_23] : memref<32x32xf32, #tpu.memory_space<vmem>>, vector<32x32xf32>
    %c0_24 = arith.constant 0 : index
    %c0_25 = arith.constant 0 : index
    %27 = vector.load %arg10[%c0_24, %c0_25] : memref<32x32xf32, #tpu.memory_space<vmem>>, vector<32x32xf32>
    %c0_26 = arith.constant 0 : index
    %c0_27 = arith.constant 0 : index
    %28 = vector.load %arg13[%c0_26, %c0_27] : memref<1x128xf32, #tpu.memory_space<vmem>>, vector<1x128xf32>
    %29 = vector.shape_cast %28 : vector<1x128xf32> to vector<1x128xf32>
    %30 = vector.broadcast %29 : vector<1x128xf32> to vector<32x128xf32>
    %cst_28 = arith.constant dense<0.000000e+00> : vector<32x32xf32>
    %31 = tpu.matmul %26, %2, %cst_28 {dimension_numbers = #tpu.dot_dimension_numbers<[1], [0], [0], [1], [0, 0, 1, 1], [], []>} : vector<32x32xf32>, vector<32x32xf32>, vector<32x32xf32> -> vector<32x32xf32>
    %c0_29 = arith.constant 0 : index
    %c0_30 = arith.constant 0 : index
    %c0_31 = arith.constant 0 : index
    %32 = vector.load %arg11[%c0_29, %c0_30, %c0_31] : memref<3x32x128xf32, #tpu.memory_space<vmem>>, vector<1x32x128xf32>
    %33 = vector.shape_cast %32 : vector<1x32x128xf32> to vector<32x128xf32>
    %cst_32 = arith.constant dense<0.000000e+00> : vector<32x128xf32>
    %34 = tpu.matmul %31, %33, %cst_32 {dimension_numbers = #tpu.dot_dimension_numbers<[1], [0], [0], [1], [0, 0, 1, 1], [], []>} : vector<32x32xf32>, vector<32x128xf32>, vector<32x128xf32> -> vector<32x128xf32>
    %35 = arith.addf %30, %34 : vector<32x128xf32>
    %c1 = arith.constant 1 : index
    %c0_33 = arith.constant 0 : index
    %c0_34 = arith.constant 0 : index
    %36 = vector.load %arg11[%c1, %c0_33, %c0_34] : memref<3x32x128xf32, #tpu.memory_space<vmem>>, vector<1x32x128xf32>
    %37 = vector.shape_cast %36 : vector<1x32x128xf32> to vector<32x128xf32>
    %cst_35 = arith.constant dense<0.000000e+00> : vector<32x128xf32>
    %38 = tpu.matmul %2, %37, %cst_35 {dimension_numbers = #tpu.dot_dimension_numbers<[1], [0], [0], [1], [0, 0, 1, 1], [], []>} : vector<32x32xf32>, vector<32x128xf32>, vector<32x128xf32> -> vector<32x128xf32>
    %39 = arith.addf %35, %38 : vector<32x128xf32>
    %cst_36 = arith.constant dense<0.000000e+00> : vector<32x32xf32>
    %40 = tpu.matmul %27, %2, %cst_36 {dimension_numbers = #tpu.dot_dimension_numbers<[1], [0], [0], [1], [0, 0, 1, 1], [], []>} : vector<32x32xf32>, vector<32x32xf32>, vector<32x32xf32> -> vector<32x32xf32>
    %c2 = arith.constant 2 : index
    %c0_37 = arith.constant 0 : index
    %c0_38 = arith.constant 0 : index
    %41 = vector.load %arg11[%c2, %c0_37, %c0_38] : memref<3x32x128xf32, #tpu.memory_space<vmem>>, vector<1x32x128xf32>
    %42 = vector.shape_cast %41 : vector<1x32x128xf32> to vector<32x128xf32>
    %cst_39 = arith.constant dense<0.000000e+00> : vector<32x128xf32>
    %43 = tpu.matmul %40, %42, %cst_39 {dimension_numbers = #tpu.dot_dimension_numbers<[1], [0], [0], [1], [0, 0, 1, 1], [], []>} : vector<32x32xf32>, vector<32x128xf32>, vector<32x128xf32> -> vector<32x128xf32>
    %44 = arith.addf %39, %43 : vector<32x128xf32>
    %cst_40 = arith.constant dense<0.000000e+00> : vector<32x128xf32>
    %45 = tpu.matmul %26, %25, %cst_40 {dimension_numbers = #tpu.dot_dimension_numbers<[1], [0], [0], [1], [0, 0, 1, 1], [], []>} : vector<32x32xf32>, vector<32x128xf32>, vector<32x128xf32> -> vector<32x128xf32>
    %c0_41 = arith.constant 0 : index
    %c0_42 = arith.constant 0 : index
    %c0_43 = arith.constant 0 : index
    %46 = vector.load %arg12[%c0_41, %c0_42, %c0_43] : memref<3x128x128xf32, #tpu.memory_space<vmem>>, vector<1x128x128xf32>
    %47 = vector.shape_cast %46 : vector<1x128x128xf32> to vector<128x128xf32>
    %cst_44 = arith.constant dense<0.000000e+00> : vector<32x128xf32>
    %48 = tpu.matmul %45, %47, %cst_44 {dimension_numbers = #tpu.dot_dimension_numbers<[1], [0], [0], [1], [0, 0, 1, 1], [], []>} : vector<32x128xf32>, vector<128x128xf32>, vector<32x128xf32> -> vector<32x128xf32>
    %49 = arith.addf %44, %48 : vector<32x128xf32>
    %c1_45 = arith.constant 1 : index
    %c0_46 = arith.constant 0 : index
    %c0_47 = arith.constant 0 : index
    %50 = vector.load %arg12[%c1_45, %c0_46, %c0_47] : memref<3x128x128xf32, #tpu.memory_space<vmem>>, vector<1x128x128xf32>
    %51 = vector.shape_cast %50 : vector<1x128x128xf32> to vector<128x128xf32>
    %cst_48 = arith.constant dense<0.000000e+00> : vector<32x128xf32>
    %52 = tpu.matmul %25, %51, %cst_48 {dimension_numbers = #tpu.dot_dimension_numbers<[1], [0], [0], [1], [0, 0, 1, 1], [], []>} : vector<32x128xf32>, vector<128x128xf32>, vector<32x128xf32> -> vector<32x128xf32>
    %53 = arith.addf %49, %52 : vector<32x128xf32>
    %cst_49 = arith.constant dense<0.000000e+00> : vector<32x128xf32>
    %54 = tpu.matmul %27, %25, %cst_49 {dimension_numbers = #tpu.dot_dimension_numbers<[1], [0], [0], [1], [0, 0, 1, 1], [], []>} : vector<32x32xf32>, vector<32x128xf32>, vector<32x128xf32> -> vector<32x128xf32>
    %c2_50 = arith.constant 2 : index
    %c0_51 = arith.constant 0 : index
    %c0_52 = arith.constant 0 : index
    %55 = vector.load %arg12[%c2_50, %c0_51, %c0_52] : memref<3x128x128xf32, #tpu.memory_space<vmem>>, vector<1x128x128xf32>
    %56 = vector.shape_cast %55 : vector<1x128x128xf32> to vector<128x128xf32>
    %cst_53 = arith.constant dense<0.000000e+00> : vector<32x128xf32>
    %57 = tpu.matmul %54, %56, %cst_53 {dimension_numbers = #tpu.dot_dimension_numbers<[1], [0], [0], [1], [0, 0, 1, 1], [], []>} : vector<32x128xf32>, vector<128x128xf32>, vector<32x128xf32> -> vector<32x128xf32>
    %58 = arith.addf %53, %57 : vector<32x128xf32>
    %cst_54 = arith.constant 0.000000e+00 : f32
    %59 = vector.broadcast %cst_54 : f32 to vector<32x128xf32>
    %60 = arith.maximumf %58, %59 : vector<32x128xf32>
    %c0_55 = arith.constant 0 : index
    %c0_56 = arith.constant 0 : index
    %61 = vector.load %arg15[%c0_55, %c0_56] : memref<1x128xf32, #tpu.memory_space<vmem>>, vector<1x128xf32>
    %62 = vector.shape_cast %61 : vector<1x128xf32> to vector<1x128xf32>
    %63 = vector.broadcast %62 : vector<1x128xf32> to vector<32x128xf32>
    %cst_57 = arith.constant dense<0.000000e+00> : vector<32x128xf32>
    %64 = tpu.matmul %26, %60, %cst_57 {dimension_numbers = #tpu.dot_dimension_numbers<[1], [0], [0], [1], [0, 0, 1, 1], [], []>} : vector<32x32xf32>, vector<32x128xf32>, vector<32x128xf32> -> vector<32x128xf32>
    %c0_58 = arith.constant 0 : index
    %c0_59 = arith.constant 0 : index
    %c0_60 = arith.constant 0 : index
    %65 = vector.load %arg14[%c0_58, %c0_59, %c0_60] : memref<3x128x128xf32, #tpu.memory_space<vmem>>, vector<1x128x128xf32>
    %66 = vector.shape_cast %65 : vector<1x128x128xf32> to vector<128x128xf32>
    %cst_61 = arith.constant dense<0.000000e+00> : vector<32x128xf32>
    %67 = tpu.matmul %64, %66, %cst_61 {dimension_numbers = #tpu.dot_dimension_numbers<[1], [0], [0], [1], [0, 0, 1, 1], [], []>} : vector<32x128xf32>, vector<128x128xf32>, vector<32x128xf32> -> vector<32x128xf32>
    %68 = arith.addf %63, %67 : vector<32x128xf32>
    %c1_62 = arith.constant 1 : index
    %c0_63 = arith.constant 0 : index
    %c0_64 = arith.constant 0 : index
    %69 = vector.load %arg14[%c1_62, %c0_63, %c0_64] : memref<3x128x128xf32, #tpu.memory_space<vmem>>, vector<1x128x128xf32>
    %70 = vector.shape_cast %69 : vector<1x128x128xf32> to vector<128x128xf32>
    %cst_65 = arith.constant dense<0.000000e+00> : vector<32x128xf32>
    %71 = tpu.matmul %60, %70, %cst_65 {dimension_numbers = #tpu.dot_dimension_numbers<[1], [0], [0], [1], [0, 0, 1, 1], [], []>} : vector<32x128xf32>, vector<128x128xf32>, vector<32x128xf32> -> vector<32x128xf32>
    %72 = arith.addf %68, %71 : vector<32x128xf32>
    %cst_66 = arith.constant dense<0.000000e+00> : vector<32x128xf32>
    %73 = tpu.matmul %27, %60, %cst_66 {dimension_numbers = #tpu.dot_dimension_numbers<[1], [0], [0], [1], [0, 0, 1, 1], [], []>} : vector<32x32xf32>, vector<32x128xf32>, vector<32x128xf32> -> vector<32x128xf32>
    %c2_67 = arith.constant 2 : index
    %c0_68 = arith.constant 0 : index
    %c0_69 = arith.constant 0 : index
    %74 = vector.load %arg14[%c2_67, %c0_68, %c0_69] : memref<3x128x128xf32, #tpu.memory_space<vmem>>, vector<1x128x128xf32>
    %75 = vector.shape_cast %74 : vector<1x128x128xf32> to vector<128x128xf32>
    %cst_70 = arith.constant dense<0.000000e+00> : vector<32x128xf32>
    %76 = tpu.matmul %73, %75, %cst_70 {dimension_numbers = #tpu.dot_dimension_numbers<[1], [0], [0], [1], [0, 0, 1, 1], [], []>} : vector<32x128xf32>, vector<128x128xf32>, vector<32x128xf32> -> vector<32x128xf32>
    %77 = arith.addf %72, %76 : vector<32x128xf32>
    %cst_71 = arith.constant 0.000000e+00 : f32
    %78 = vector.broadcast %cst_71 : f32 to vector<32x128xf32>
    %79 = arith.maximumf %77, %78 : vector<32x128xf32>
    %c0_72 = arith.constant 0 : index
    %c0_73 = arith.constant 0 : index
    %80 = vector.load %arg16[%c0_72, %c0_73] : memref<32x128xf32, #tpu.memory_space<vmem>>, vector<32x128xf32>
    tpu.vector_store %arg16[%c0_72, %c0_73], %79 {strides = array<i32>} : memref<32x128xf32, #tpu.memory_space<vmem>>, vector<32x128xf32>,
    return
  }
  func.func @transform_0(%arg0: i32) -> (i32, i32) {
    %c0_i32 = arith.constant 0 : i32
    %c0_i32_0 = arith.constant 0 : i32
    return %arg0, %c0_i32 : i32, i32
  }
  func.func @transform_1(%arg0: i32) -> (i32, i32) {
    %c0_i32 = arith.constant 0 : i32
    %c0_i32_0 = arith.constant 0 : i32
    return %arg0, %c0_i32 : i32, i32
  }
  func.func @transform_2(%arg0: i32) -> (i32, i32) {
    %c0_i32 = arith.constant 0 : i32
    %c0_i32_0 = arith.constant 0 : i32
    %c0_i32_1 = arith.constant 0 : i32
    return %c0_i32, %c0_i32_0 : i32, i32
  }
  func.func @transform_3(%arg0: i32) -> (i32, i32) {
    %c0_i32 = arith.constant 0 : i32
    %c0_i32_0 = arith.constant 0 : i32
    %c0_i32_1 = arith.constant 0 : i32
    return %c0_i32, %c0_i32_0 : i32, i32
  }
  func.func @transform_4(%arg0: i32) -> (i32, i32) {
    %c0_i32 = arith.constant 0 : i32
    %c0_i32_0 = arith.constant 0 : i32
    %c0_i32_1 = arith.constant 0 : i32
    return %c0_i32, %c0_i32_0 : i32, i32
  }
  func.func @transform_5(%arg0: i32) -> (i32, i32) {
    %c0_i32 = arith.constant 0 : i32
    %c0_i32_0 = arith.constant 0 : i32
    %c0_i32_1 = arith.constant 0 : i32
    return %c0_i32, %c0_i32_0 : i32, i32
  }
  func.func @transform_6(%arg0: i32) -> (i32, i32) {
    %c0_i32 = arith.constant 0 : i32
    %c0_i32_0 = arith.constant 0 : i32
    %c0_i32_1 = arith.constant 0 : i32
    return %c0_i32, %c0_i32_0 : i32, i32
  }
  func.func @transform_7(%arg0: i32) -> (i32, i32) {
    %c0_i32 = arith.constant 0 : i32
    %c0_i32_0 = arith.constant 0 : i32
    %c0_i32_1 = arith.constant 0 : i32
    return %c0_i32, %c0_i32_0 : i32, i32
  }
  func.func @transform_8(%arg0: i32) -> (i32, i32) {
    %c0_i32 = arith.constant 0 : i32
    %c0_i32_0 = arith.constant 0 : i32
    %c0_i32_1 = arith.constant 0 : i32
    return %c0_i32, %c0_i32_0 : i32, i32
  }
  func.func @transform_9(%arg0: i32) -> (i32, i32) {
    %c0_i32 = arith.constant 0 : i32
    %c0_i32_0 = arith.constant 0 : i32
    %c0_i32_1 = arith.constant 0 : i32
    return %c0_i32, %c0_i32_0 : i32, i32
  }
  func.func @transform_10(%arg0: i32) -> (i32, i32, i32) {
    %c0_i32 = arith.constant 0 : i32
    %c0_i32_0 = arith.constant 0 : i32
    %c0_i32_1 = arith.constant 0 : i32
    %c0_i32_2 = arith.constant 0 : i32
    return %c0_i32, %c0_i32_0, %c0_i32_1 : i32, i32, i32
  }
  func.func @transform_11(%arg0: i32) -> (i32, i32, i32) {
    %c0_i32 = arith.constant 0 : i32
    %c0_i32_0 = arith.constant 0 : i32
    %c0_i32_1 = arith.constant 0 : i32
    %c0_i32_2 = arith.constant 0 : i32
    return %c0_i32, %c0_i32_0, %c0_i32_1 : i32, i32, i32
  }
  func.func @transform_12(%arg0: i32) -> (i32, i32) {
    %c0_i32 = arith.constant 0 : i32
    %c0_i32_0 = arith.constant 0 : i32
    %c0_i32_1 = arith.constant 0 : i32
    return %c0_i32, %c0_i32_0 : i32, i32
  }
  func.func @transform_13(%arg0: i32) -> (i32, i32, i32) {
    %c0_i32 = arith.constant 0 : i32
    %c0_i32_0 = arith.constant 0 : i32
    %c0_i32_1 = arith.constant 0 : i32
    %c0_i32_2 = arith.constant 0 : i32
    return %c0_i32, %c0_i32_0, %c0_i32_1 : i32, i32, i32
  }
  func.func @transform_14(%arg0: i32) -> (i32, i32) {
    %c0_i32 = arith.constant 0 : i32
    %c0_i32_0 = arith.constant 0 : i32
    %c0_i32_1 = arith.constant 0 : i32
    return %c0_i32, %c0_i32_0 : i32, i32
  }
  func.func @transform_15(%arg0: i32) -> (i32, i32) {
    %c0_i32 = arith.constant 0 : i32
    %c0_i32_0 = arith.constant 0 : i32
    return %arg0, %c0_i32 : i32, i32
  }
}

</mosaic_0001>

<llo_original>
// kernel: decoder_block_forward.1
$region0: #{decoder_block_forward.1}
  #allocation0 [shape = 'u32[]', space=smem, size = 0x4, offset = 0x4, fixed_abs, tag = 'smem constant byte address 0x4 - core index']
  #allocation1 [shape = 'u32[72,128]{1,0:T(1,128)}', space=vmem, size = 0x9000, scoped, tag = 'internal scratch']
  %s0 = inlined_call_operand.vmem [shape: f32[16,32], index: 0, kind: input, shape index: {}]
  %s1 = inlined_call_operand.vmem [shape: f32[32,128], index: 1, kind: input, shape index: {}]
  %s2 = inlined_call_operand.vmem [shape: f32[32,16], index: 2, kind: input, shape index: {}]
  %s3 = inlined_call_operand.vmem [shape: f32[32,128], index: 3, kind: input, shape index: {}]
  %s4 = inlined_call_operand.vmem [shape: f32[128,128], index: 4, kind: input, shape index: {}]
  %s5 = inlined_call_operand.vmem [shape: f32[1,128], index: 5, kind: input, shape index: {}]
  %s6 = inlined_call_operand.vmem [shape: f32[128,128], index: 6, kind: input, shape index: {}]
  %s7 = inlined_call_operand.vmem [shape: f32[1,128], index: 7, kind: input, shape index: {}]
  %s8 = inlined_call_operand.vmem [shape: f32[32,32], index: 8, kind: input, shape index: {}]
  %s9 = inlined_call_operand.vmem [shape: f32[32,32], index: 9, kind: input, shape index: {}]
  %s10 = inlined_call_operand.vmem [shape: f32[3,32,128], index: 10, kind: input, shape index: {}]
  %s11 = inlined_call_operand.vmem [shape: f32[3,128,128], index: 11, kind: input, shape index: {}]
  %s12 = inlined_call_operand.vmem [shape: f32[1,128], index: 12, kind: input, shape index: {}]
  %s13 = inlined_call_operand.vmem [shape: f32[3,128,128], index: 13, kind: input, shape index: {}]
  %s14 = inlined_call_operand.vmem [shape: f32[1,128], index: 14, kind: input, shape index: {}]
  %s15 = inlined_call_operand.vmem [shape: f32[32,128], index: 15, kind: output, shape index: {}]
  %s16 = sld [smem:[#allocation0]]
  $region70: #{decoder_block_forward.1} parent=0
    _
  %s18 = ssub.s32 1, %s16
  %s19 = scalar_select 0, %s18, %s16
  // Predicated region
  $region2: #{decoder_block_forward.1} parent=0 // pred_check
    _
  $region3: #{decoder_block_forward.1} parent=0 // pred_check_branch
    %21 = sbr.rel (0) target = $region5
  $region4: #{decoder_block_forward.1} parent=0 // pred_region
    _
  $region5: #{decoder_block_forward.1} parent=0 // pred_fallthru
    _
  // Predicated region
  $region6: #{decoder_block_forward.1} parent=0 // pred_check
    _
  $region7: #{decoder_block_forward.1} parent=0 // pred_check_branch
    %23 = sbr.rel (0) target = $region9
  $region8: #{decoder_block_forward.1} parent=0 // pred_region
    _
  $region9: #{decoder_block_forward.1} parent=0 // pred_fallthru
    _
  // Predicated region
  $region10: #{decoder_block_forward.1} parent=0 // pred_check
    _
  $region11: #{decoder_block_forward.1} parent=0 // pred_check_branch
    %25 = sbr.rel (0) target = $region13
  $region12: #{decoder_block_forward.1} parent=0 // pred_region
    _
  $region13: #{decoder_block_forward.1} parent=0 // pred_fallthru
    _
  // Predicated region
  $region14: #{decoder_block_forward.1} parent=0 // pred_check
    _
  $region15: #{decoder_block_forward.1} parent=0 // pred_check_branch
    %27 = sbr.rel (0) target = $region17
  $region16: #{decoder_block_forward.1} parent=0 // pred_region
    _
  $region17: #{decoder_block_forward.1} parent=0 // pred_fallthru
    _
  // Predicated region
  $region18: #{decoder_block_forward.1} parent=0 // pred_check
    _
  $region19: #{decoder_block_forward.1} parent=0 // pred_check_branch
    %29 = sbr.rel (0) target = $region21
  $region20: #{decoder_block_forward.1} parent=0 // pred_region
    _
  $region21: #{decoder_block_forward.1} parent=0 // pred_fallthru
    _
  // Predicated region
  $region22: #{decoder_block_forward.1} parent=0 // pred_check
    _
  $region23: #{decoder_block_forward.1} parent=0 // pred_check_branch
    %31 = sbr.rel (0) target = $region25
  $region24: #{decoder_block_forward.1} parent=0 // pred_region
    _
  $region25: #{decoder_block_forward.1} parent=0 // pred_fallthru
    _
  // Predicated region
  $region26: #{decoder_block_forward.1} parent=0 // pred_check
    _
  $region27: #{decoder_block_forward.1} parent=0 // pred_check_branch
    %33 = sbr.rel (0) target = $region29
  $region28: #{decoder_block_forward.1} parent=0 // pred_region
    _
  $region29: #{decoder_block_forward.1} parent=0 // pred_fallthru
    _
  // Predicated region
  $region30: #{decoder_block_forward.1} parent=0 // pred_check
    _
  $region31: #{decoder_block_forward.1} parent=0 // pred_check_branch
    %35 = sbr.rel (0) target = $region33
  $region32: #{decoder_block_forward.1} parent=0 // pred_region
    _
  $region33: #{decoder_block_forward.1} parent=0 // pred_fallthru
    _
  // Predicated region
  $region34: #{decoder_block_forward.1} parent=0 // pred_check
    _
  $region35: #{decoder_block_forward.1} parent=0 // pred_check_branch
    %37 = sbr.rel (0) target = $region37
  $region36: #{decoder_block_forward.1} parent=0 // pred_region
    _
  $region37: #{decoder_block_forward.1} parent=0 // pred_fallthru
    _
  // Predicated region
  $region38: #{decoder_block_forward.1} parent=0 // pred_check
    _
  $region39: #{decoder_block_forward.1} parent=0 // pred_check_branch
    %39 = sbr.rel (0) target = $region41
  $region40: #{decoder_block_forward.1} parent=0 // pred_region
    _
  $region41: #{decoder_block_forward.1} parent=0 // pred_fallthru
    _
  // Predicated region
  $region42: #{decoder_block_forward.1} parent=0 // pred_check
    _
  $region43: #{decoder_block_forward.1} parent=0 // pred_check_branch
    %41 = sbr.rel (0) target = $region45
  $region44: #{decoder_block_forward.1} parent=0 // pred_region
    _
  $region45: #{decoder_block_forward.1} parent=0 // pred_fallthru
    _
  // Predicated region
  $region46: #{decoder_block_forward.1} parent=0 // pred_check
    _
  $region47: #{decoder_block_forward.1} parent=0 // pred_check_branch
    %43 = sbr.rel (0) target = $region49
  $region48: #{decoder_block_forward.1} parent=0 // pred_region
    _
  $region49: #{decoder_block_forward.1} parent=0 // pred_fallthru
    _
  // Predicated region
  $region50: #{decoder_block_forward.1} parent=0 // pred_check
    _
  $region51: #{decoder_block_forward.1} parent=0 // pred_check_branch
    %45 = sbr.rel (0) target = $region53
  $region52: #{decoder_block_forward.1} parent=0 // pred_region
    _
  $region53: #{decoder_block_forward.1} parent=0 // pred_fallthru
    _
  // Predicated region
  $region54: #{decoder_block_forward.1} parent=0 // pred_check
    _
  $region55: #{decoder_block_forward.1} parent=0 // pred_check_branch
    %47 = sbr.rel (0) target = $region57
  $region56: #{decoder_block_forward.1} parent=0 // pred_region
    _
  $region57: #{decoder_block_forward.1} parent=0 // pred_fallthru
    _
  // Predicated region
  $region58: #{decoder_block_forward.1} parent=0 // pred_check
    _
  $region59: #{decoder_block_forward.1} parent=0 // pred_check_branch
    %49 = sbr.rel (0) target = $region61
  $region60: #{decoder_block_forward.1} parent=0 // pred_region
    _
  $region61: #{decoder_block_forward.1} parent=0 // pred_fallthru
    _
  %v50 = vld [vmem:[%s2] sm:$0xff]
  %v51 = vld [vmem:[%s2 + $0x8] sm:$0xff]
  %v52 = vld [vmem:[%s2 + $0x10] sm:$0xff]
  %v53 = vld [vmem:[%s2 + $0x18] sm:$0xff]
  %v54 = vld [vmem:[%s0] sm:$0xff]
  %v55 = vld [vmem:[%s0 + $0x8] sm:$0xff]
  %vm56 = vcmask 130048
  %v58 = vsel %vm56, %v50, 0
  %v61 = vsel %vm56, %v51, 0
  %v64 = vsel %vm56, %v52, 0
  %v67 = vsel %vm56, %v53, 0
  %69 = vmatpush.msra.mxu0 0.0
  %70 = vmatpush.msra.mxu0 0.0
  %71 = vmatpush.msra.mxu0 0.0
  %72 = vmatpush.msra.mxu0 0.0
  %73 = vmatpush.msra.mxu0 0.0
  %74 = vmatpush.msra.mxu0 0.0
  %75 = vmatpush.msra.mxu0 0.0
  %76 = vmatpush.msra.mxu0 0.0
  %77 = vmatpush.msra.mxu0 0.0
  %78 = vmatpush.msra.mxu0 0.0
  %79 = vmatpush.msra.mxu0 0.0
  %80 = vmatpush.msra.mxu0 0.0
  %81 = vmatpush.msra.mxu0 0.0
  %82 = vmatpush.msra.mxu0 0.0
  %83 = vmatpush.msra.mxu0 %v55
  %84 = vmatpush.msra.mxu0 %v54
  %85 = vmatmul.f32.gmra.mxu0 %v58
  %v86 = vpop.f32.mrf.mxu0
  %v87 = vadd.f32 0.0, %v86
  %88 = vmatmul.f32.gmra.mxu0 %v61
  %v89 = vpop.f32.mrf.mxu0
  %v90 = vadd.f32 0.0, %v89
  %91 = vmatmul.f32.gmra.mxu0 %v64
  %v92 = vpop.f32.mrf.mxu0
  %v93 = vadd.f32 0.0, %v92
  %94 = vmatmul.f32.gmra.mxu0 %v67
  %v95 = vpop.f32.mrf.mxu0
  %v96 = vadd.f32 0.0, %v95
  %97 = vdwg.mxu0
  %v98 = vld [vmem:[%s3] sm:$0xff]
  %v99 = vld [vmem:[%s3 + $0x8] sm:$0xff]
  %v100 = vld [vmem:[%s3 + $0x10] sm:$0xff]
  %v101 = vld [vmem:[%s3 + $0x18] sm:$0xff]
  %v102 = vld [vmem:[%s1] sm:$0xff]
  %v103 = vld [vmem:[%s1 + $0x8] sm:$0xff]
  %v104 = vld [vmem:[%s1 + $0x10] sm:$0xff]
  %v105 = vld [vmem:[%s1 + $0x18] sm:$0xff]
  %v106 = vld [vmem:[%s4] sm:$0xff]
  %v107 = vld [vmem:[%s4 + $0x8] sm:$0xff]
  %v108 = vld [vmem:[%s4 + $0x10] sm:$0xff]
  %v109 = vld [vmem:[%s4 + $0x18] sm:$0xff]
  %v110 = vld [vmem:[%s4 + $0x20] sm:$0xff]
  %v111 = vld [vmem:[%s4 + $0x28] sm:$0xff]
  %v112 = vld [vmem:[%s4 + $0x30] sm:$0xff]
  %v113 = vld [vmem:[%s4 + $0x38] sm:$0xff]
  %v114 = vld [vmem:[%s4 + $0x40] sm:$0xff]
  %v115 = vld [vmem:[%s4 + $0x48] sm:$0xff]
  %v116 = vld [vmem:[%s4 + $0x50] sm:$0xff]
  %v117 = vld [vmem:[%s4 + $0x58] sm:$0xff]
  %v118 = vld [vmem:[%s4 + $0x60] sm:$0xff]
  %v119 = vld [vmem:[%s4 + $0x68] sm:$0xff]
  %v120 = vld [vmem:[%s4 + $0x70] sm:$0xff]
  %v121 = vld [vmem:[%s4 + $0x78] sm:$0xff]
  %122 = vmatpush.msra.mxu0 %v121
  %123 = vmatpush.msra.mxu0 %v120
  %124 = vmatpush.msra.mxu0 %v119
  %125 = vmatpush.msra.mxu0 %v118
  %126 = vmatpush.msra.mxu0 %v117
  %127 = vmatpush.msra.mxu0 %v116
  %128 = vmatpush.msra.mxu0 %v115
  %129 = vmatpush.msra.mxu0 %v114
  %130 = vmatpush.msra.mxu0 %v113
  %131 = vmatpush.msra.mxu0 %v112
  %132 = vmatpush.msra.mxu0 %v111
  %133 = vmatpush.msra.mxu0 %v110
  %134 = vmatpush.msra.mxu0 %v109
  %135 = vmatpush.msra.mxu0 %v108
  %136 = vmatpush.msra.mxu0 %v107
  %137 = vmatpush.msra.mxu0 %v106
  %138 = vmatmul.f32.gmra.mxu0 %v102
  %v139 = vpop.f32.mrf.mxu0
  %v140 = vadd.f32 0.0, %v139
  %141 = vmatmul.f32.gmra.mxu0 %v103
  %v142 = vpop.f32.mrf.mxu0
  %v143 = vadd.f32 0.0, %v142
  %144 = vmatmul.f32.gmra.mxu0 %v104
  %v145 = vpop.f32.mrf.mxu0
  %v146 = vadd.f32 0.0, %v145
  %147 = vmatmul.f32.gmra.mxu0 %v105
  %v148 = vpop.f32.mrf.mxu0
  %v149 = vadd.f32 0.0, %v148
  %150 = vdwg.mxu0
  %vm151 = vcmask 261120
  %v153 = vsel %vm151, %v87, 0
  %v156 = vsel %vm151, %v90, 0
  %v159 = vsel %vm151, %v93, 0
  %v162 = vsel %vm151, %v96, 0
  %164 = vmatpush.msra.mxu0 0.0
  %165 = vmatpush.msra.mxu0 0.0
  %166 = vmatpush.msra.mxu0 0.0
  %167 = vmatpush.msra.mxu0 0.0
  %168 = vmatpush.msra.mxu0 0.0
  %169 = vmatpush.msra.mxu0 0.0
  %170 = vmatpush.msra.mxu0 0.0
  %171 = vmatpush.msra.mxu0 0.0
  %172 = vmatpush.msra.mxu0 0.0
  %173 = vmatpush.msra.mxu0 0.0
  %174 = vmatpush.msra.mxu0 0.0
  %175 = vmatpush.msra.mxu0 0.0
  %176 = vmatpush.msra.mxu0 %v101
  %177 = vmatpush.msra.mxu0 %v100
  %178 = vmatpush.msra.mxu0 %v99
  %179 = vmatpush.msra.mxu0 %v98
  %180 = vmatmul.f32.gmra.mxu0 %v153
  %v181 = vpop.f32.mrf.mxu0
  %v182 = vadd.f32 %v140, %v181
  %183 = vmatmul.f32.gmra.mxu0 %v156
  %v184 = vpop.f32.mrf.mxu0
  %v185 = vadd.f32 %v143, %v184
  %186 = vmatmul.f32.gmra.mxu0 %v159
  %v187 = vpop.f32.mrf.mxu0
  %v188 = vadd.f32 %v146, %v187
  %189 = vmatmul.f32.gmra.mxu0 %v162
  %v190 = vpop.f32.mrf.mxu0
  %v191 = vadd.f32 %v149, %v190
  %192 = vdwg.mxu0
  %v193 = vld [vmem:[%s5] sm:$0x1]
  %v195 = vperm.slane %v193, 0
  %v197 = vadd.f32 %v182, %v195
  %v198 = vadd.f32 %v185, %v195
  %v199 = vadd.f32 %v188, %v195
  %v200 = vadd.f32 %v191, %v195
  %v201 = vmax.f32 %v197, 0.0
  %v202 = vmax.f32 %v198, 0.0
  %v203 = vmax.f32 %v199, 0.0
  %v204 = vmax.f32 %v200, 0.0
  %v205 = vld [vmem:[%s6] sm:$0xff]
  %v206 = vld [vmem:[%s6 + $0x8] sm:$0xff]
  %v207 = vld [vmem:[%s6 + $0x10] sm:$0xff]
  %v208 = vld [vmem:[%s6 + $0x18] sm:$0xff]
  %v209 = vld [vmem:[%s6 + $0x20] sm:$0xff]
  %v210 = vld [vmem:[%s6 + $0x28] sm:$0xff]
  %v211 = vld [vmem:[%s6 + $0x30] sm:$0xff]
  %v212 = vld [vmem:[%s6 + $0x38] sm:$0xff]
  %v213 = vld [vmem:[%s6 + $0x40] sm:$0xff]
  %v214 = vld [vmem:[%s6 + $0x48] sm:$0xff]
  %v215 = vld [vmem:[%s6 + $0x50] sm:$0xff]
  %v216 = vld [vmem:[%s6 + $0x58] sm:$0xff]
  %v217 = vld [vmem:[%s6 + $0x60] sm:$0xff]
  %v218 = vld [vmem:[%s6 + $0x68] sm:$0xff]
  %v219 = vld [vmem:[%s6 + $0x70] sm:$0xff]
  %v220 = vld [vmem:[%s6 + $0x78] sm:$0xff]
  %v221 = vld [vmem:[%s7] sm:$0x1]
  %v223 = vperm.slane %v221, 0
  %225 = vmatpush.msra.mxu0 %v220
  %226 = vmatpush.msra.mxu0 %v219
  %227 = vmatpush.msra.mxu0 %v218
  %228 = vmatpush.msra.mxu0 %v217
  %229 = vmatpush.msra.mxu0 %v216
  %230 = vmatpush.msra.mxu0 %v215
  %231 = vmatpush.msra.mxu0 %v214
  %232 = vmatpush.msra.mxu0 %v213
  %233 = vmatpush.msra.mxu0 %v212
  %234 = vmatpush.msra.mxu0 %v211
  %235 = vmatpush.msra.mxu0 %v210
  %236 = vmatpush.msra.mxu0 %v209
  %237 = vmatpush.msra.mxu0 %v208
  %238 = vmatpush.msra.mxu0 %v207
  %239 = vmatpush.msra.mxu0 %v206
  %240 = vmatpush.msra.mxu0 %v205
  %241 = vmatmul.f32.gmra.mxu0 %v201
  %v242 = vpop.f32.mrf.mxu0
  %v243 = vadd.f32 %v223, %v242
  %244 = vmatmul.f32.gmra.mxu0 %v202
  %v245 = vpop.f32.mrf.mxu0
  %v246 = vadd.f32 %v223, %v245
  %247 = vmatmul.f32.gmra.mxu0 %v203
  %v248 = vpop.f32.mrf.mxu0
  %v249 = vadd.f32 %v223, %v248
  %250 = vmatmul.f32.gmra.mxu0 %v204
  %v251 = vpop.f32.mrf.mxu0
  %v252 = vadd.f32 %v223, %v251
  %253 = vdwg.mxu0
  %v254 = vsub.f32 0.0, %v243
  %v255 = vsub.f32 0.0, %v246
  %v256 = vsub.f32 0.0, %v249
  %v257 = vsub.f32 0.0, %v252
  %v258 = vmul.f32 %v254, 1.442695
  %v259 = vpow.pop %v258
  %v260 = vmul.f32 %v255, 1.442695
  %v261 = vpow.pop %v260
  %v262 = vmul.f32 %v256, 1.442695
  %v263 = vpow.pop %v262
  %v264 = vmul.f32 %v257, 1.442695
  %v265 = vpow.pop %v264
  %v266 = vadd.f32 %v259, 1.0
  %v267 = vadd.f32 %v261, 1.0
  %v268 = vadd.f32 %v263, 1.0
  %v269 = vadd.f32 %v265, 1.0
  %v270 = vrcp.pop %v266
  %v271 = vmul.f32 %v266, %v270
  %v272 = vsub.f32 1.0, %v271
  %v273 = vmul.f32 %v270, %v272
  %v274 = vadd.f32 %v270, %v273
  %vm275 = vweird.f32 %v266
  %vm276 = vweird.f32 %v270
  %vm277 = vmor %vm275, %vm276
  %v278 = vsel %vm277, %v270, %v274
  %v279 = vand.u32 2147483647, %v266
  %vm280 = vcmp.eq.f32.partialorder %v279, 8.507059e+37
  %v281 = vand.u32 %v266, 2147483648
  %v282 = vor.u32 1.1754944e-38, %v281
  %v283 = vsel %vm280, %v282, %v278
  %v284 = vmul.f32 1.0, %v283
  %v285 = vrcp.pop %v267
  %v286 = vmul.f32 %v267, %v285
  %v287 = vsub.f32 1.0, %v286
  %v288 = vmul.f32 %v285, %v287
  %v289 = vadd.f32 %v285, %v288
  %vm290 = vweird.f32 %v267
  %vm291 = vweird.f32 %v285
  %vm292 = vmor %vm290, %vm291
  %v293 = vsel %vm292, %v285, %v289
  %v294 = vand.u32 2147483647, %v267
  %vm295 = vcmp.eq.f32.partialorder %v294, 8.507059e+37
  %v296 = vand.u32 %v267, 2147483648
  %v297 = vor.u32 1.1754944e-38, %v296
  %v298 = vsel %vm295, %v297, %v293
  %v299 = vmul.f32 1.0, %v298
  %v300 = vrcp.pop %v268
  %v301 = vmul.f32 %v268, %v300
  %v302 = vsub.f32 1.0, %v301
  %v303 = vmul.f32 %v300, %v302
  %v304 = vadd.f32 %v300, %v303
  %vm305 = vweird.f32 %v268
  %vm306 = vweird.f32 %v300
  %vm307 = vmor %vm305, %vm306
  %v308 = vsel %vm307, %v300, %v304
  %v309 = vand.u32 2147483647, %v268
  %vm310 = vcmp.eq.f32.partialorder %v309, 8.507059e+37
  %v311 = vand.u32 %v268, 2147483648
  %v312 = vor.u32 1.1754944e-38, %v311
  %v313 = vsel %vm310, %v312, %v308
  %v314 = vmul.f32 1.0, %v313
  %v315 = vrcp.pop %v269
  %v316 = vmul.f32 %v269, %v315
  %v317 = vsub.f32 1.0, %v316
  %v318 = vmul.f32 %v315, %v317
  %v319 = vadd.f32 %v315, %v318
  %vm320 = vweird.f32 %v269
  %vm321 = vweird.f32 %v315
  %vm322 = vmor %vm320, %vm321
  %v323 = vsel %vm322, %v315, %v319
  %v324 = vand.u32 2147483647, %v269
  %vm325 = vcmp.eq.f32.partialorder %v324, 8.507059e+37
  %v326 = vand.u32 %v269, 2147483648
  %v327 = vor.u32 1.1754944e-38, %v326
  %v328 = vsel %vm325, %v327, %v323
  %v329 = vmul.f32 1.0, %v328
  %v330 = vld [vmem:[%s8] sm:$0xff]
  %v331 = vld [vmem:[%s8 + $0x8] sm:$0xff]
  %v332 = vld [vmem:[%s8 + $0x10] sm:$0xff]
  %v333 = vld [vmem:[%s8 + $0x18] sm:$0xff]
  %v334 = vld [vmem:[%s9] sm:$0xff]
  %v335 = vld [vmem:[%s9 + $0x8] sm:$0xff]
  %v336 = vld [vmem:[%s9 + $0x10] sm:$0xff]
  %v337 = vld [vmem:[%s9 + $0x18] sm:$0xff]
  %v338 = vld [vmem:[%s12] sm:$0x1]
  %v340 = vperm.slane %v338, 0
  %v343 = vsel %vm151, %v330, 0
  %v346 = vsel %vm151, %v331, 0
  %v349 = vsel %vm151, %v332, 0
  %v352 = vsel %vm151, %v333, 0
  %354 = vmatpush.msra.mxu0 0.0
  %355 = vmatpush.msra.mxu0 0.0
  %356 = vmatpush.msra.mxu0 0.0
  %357 = vmatpush.msra.mxu0 0.0
  %358 = vmatpush.msra.mxu0 0.0
  %359 = vmatpush.msra.mxu0 0.0
  %360 = vmatpush.msra.mxu0 0.0
  %361 = vmatpush.msra.mxu0 0.0
  %362 = vmatpush.msra.mxu0 0.0
  %363 = vmatpush.msra.mxu0 0.0
  %364 = vmatpush.msra.mxu0 0.0
  %365 = vmatpush.msra.mxu0 0.0
  %366 = vmatpush.msra.mxu0 %v96
  %367 = vmatpush.msra.mxu0 %v93
  %368 = vmatpush.msra.mxu0 %v90
  %369 = vmatpush.msra.mxu0 %v87
  %370 = vmatmul.f32.gmra.mxu0 %v343
  %v371 = vpop.f32.mrf.mxu0
  %v372 = vadd.f32 0.0, %v371
  %373 = vmatmul.f32.gmra.mxu0 %v346
  %v374 = vpop.f32.mrf.mxu0
  %v375 = vadd.f32 0.0, %v374
  %376 = vmatmul.f32.gmra.mxu0 %v349
  %v377 = vpop.f32.mrf.mxu0
  %v378 = vadd.f32 0.0, %v377
  %379 = vmatmul.f32.gmra.mxu0 %v352
  %v380 = vpop.f32.mrf.mxu0
  %v381 = vadd.f32 0.0, %v380
  %382 = vdwg.mxu0
  %v383 = vld [vmem:[%s10] sm:$0xff]
  %v384 = vld [vmem:[%s10 + $0x8] sm:$0xff]
  %v385 = vld [vmem:[%s10 + $0x10] sm:$0xff]
  %v386 = vld [vmem:[%s10 + $0x18] sm:$0xff]
  %v388 = vsel %vm151, %v372, 0
  %v391 = vsel %vm151, %v375, 0
  %v394 = vsel %vm151, %v378, 0
  %v397 = vsel %vm151, %v381, 0
  %399 = vmatpush.msra.mxu0 0.0
  %400 = vmatpush.msra.mxu0 0.0
  %401 = vmatpush.msra.mxu0 0.0
  %402 = vmatpush.msra.mxu0 0.0
  %403 = vmatpush.msra.mxu0 0.0
  %404 = vmatpush.msra.mxu0 0.0
  %405 = vmatpush.msra.mxu0 0.0
  %406 = vmatpush.msra.mxu0 0.0
  %407 = vmatpush.msra.mxu0 0.0
  %408 = vmatpush.msra.mxu0 0.0
  %409 = vmatpush.msra.mxu0 0.0
  %410 = vmatpush.msra.mxu0 0.0
  %411 = vmatpush.msra.mxu0 %v386
  %412 = vmatpush.msra.mxu0 %v385
  %413 = vmatpush.msra.mxu0 %v384
  %414 = vmatpush.msra.mxu0 %v383
  %415 = vmatmul.f32.gmra.mxu0 %v388
  %v416 = vpop.f32.mrf.mxu0
  %v417 = vadd.f32 0.0, %v416
  %418 = vmatmul.f32.gmra.mxu0 %v391
  %v419 = vpop.f32.mrf.mxu0
  %v420 = vadd.f32 0.0, %v419
  %421 = vmatmul.f32.gmra.mxu0 %v394
  %v422 = vpop.f32.mrf.mxu0
  %v423 = vadd.f32 0.0, %v422
  %424 = vmatmul.f32.gmra.mxu0 %v397
  %v425 = vpop.f32.mrf.mxu0
  %v426 = vadd.f32 0.0, %v425
  %427 = vdwg.mxu0
  %v428 = vadd.f32 %v340, %v417
  %v429 = vadd.f32 %v340, %v420
  %v430 = vadd.f32 %v340, %v423
  %v431 = vadd.f32 %v340, %v426
  %s432 = scalar_lea.vmem %s10, 32
  %v433 = vld [vmem:[%s432] sm:$0xff]
  %v434 = vld [vmem:[%s432 + $0x8] sm:$0xff]
  %v435 = vld [vmem:[%s432 + $0x10] sm:$0xff]
  %v436 = vld [vmem:[%s432 + $0x18] sm:$0xff]
  %437 = vmatpush.msra.mxu0 0.0
  %438 = vmatpush.msra.mxu0 0.0
  %439 = vmatpush.msra.mxu0 0.0
  %440 = vmatpush.msra.mxu0 0.0
  %441 = vmatpush.msra.mxu0 0.0
  %442 = vmatpush.msra.mxu0 0.0
  %443 = vmatpush.msra.mxu0 0.0
  %444 = vmatpush.msra.mxu0 0.0
  %445 = vmatpush.msra.mxu0 0.0
  %446 = vmatpush.msra.mxu0 0.0
  %447 = vmatpush.msra.mxu0 0.0
  %448 = vmatpush.msra.mxu0 0.0
  %449 = vmatpush.msra.mxu0 %v436
  %450 = vmatpush.msra.mxu0 %v435
  %451 = vmatpush.msra.mxu0 %v434
  %452 = vmatpush.msra.mxu0 %v433
  %453 = vmatmul.f32.gmra.mxu0 %v153
  %v454 = vpop.f32.mrf.mxu0
  %v455 = vadd.f32 0.0, %v454
  %456 = vmatmul.f32.gmra.mxu0 %v156
  %v457 = vpop.f32.mrf.mxu0
  %v458 = vadd.f32 0.0, %v457
  %459 = vmatmul.f32.gmra.mxu0 %v159
  %v460 = vpop.f32.mrf.mxu0
  %v461 = vadd.f32 0.0, %v460
  %462 = vmatmul.f32.gmra.mxu0 %v162
  %v463 = vpop.f32.mrf.mxu0
  %v464 = vadd.f32 0.0, %v463
  %465 = vdwg.mxu0
  %v466 = vadd.f32 %v428, %v455
  %v467 = vadd.f32 %v429, %v458
  %v468 = vadd.f32 %v430, %v461
  %v469 = vadd.f32 %v431, %v464
  %v471 = vsel %vm151, %v334, 0
  %v474 = vsel %vm151, %v335, 0
  %v477 = vsel %vm151, %v336, 0
  %v480 = vsel %vm151, %v337, 0
  %482 = vmatpush.msra.mxu0 0.0
  %483 = vmatpush.msra.mxu0 0.0
  %484 = vmatpush.msra.mxu0 0.0
  %485 = vmatpush.msra.mxu0 0.0
  %486 = vmatpush.msra.mxu0 0.0
  %487 = vmatpush.msra.mxu0 0.0
  %488 = vmatpush.msra.mxu0 0.0
  %489 = vmatpush.msra.mxu0 0.0
  %490 = vmatpush.msra.mxu0 0.0
  %491 = vmatpush.msra.mxu0 0.0
  %492 = vmatpush.msra.mxu0 0.0
  %493 = vmatpush.msra.mxu0 0.0
  %494 = vmatpush.msra.mxu0 %v96
  %495 = vmatpush.msra.mxu0 %v93
  %496 = vmatpush.msra.mxu0 %v90
  %497 = vmatpush.msra.mxu0 %v87
  %498 = vmatmul.f32.gmra.mxu0 %v471
  %v499 = vpop.f32.mrf.mxu0
  %v500 = vadd.f32 0.0, %v499
  %501 = vmatmul.f32.gmra.mxu0 %v474
  %v502 = vpop.f32.mrf.mxu0
  %v503 = vadd.f32 0.0, %v502
  %504 = vmatmul.f32.gmra.mxu0 %v477
  %v505 = vpop.f32.mrf.mxu0
  %v506 = vadd.f32 0.0, %v505
  %507 = vmatmul.f32.gmra.mxu0 %v480
  %v508 = vpop.f32.mrf.mxu0
  %v509 = vadd.f32 0.0, %v508
  %510 = vdwg.mxu0
  %s511 = scalar_lea.vmem %s10, 64
  %v512 = vld [vmem:[%s511] sm:$0xff]
  %v513 = vld [vmem:[%s511 + $0x8] sm:$0xff]
  %v514 = vld [vmem:[%s511 + $0x10] sm:$0xff]
  %v515 = vld [vmem:[%s511 + $0x18] sm:$0xff]
  %v517 = vsel %vm151, %v500, 0
  %v520 = vsel %vm151, %v503, 0
  %v523 = vsel %vm151, %v506, 0
  %v526 = vsel %vm151, %v509, 0
  %528 = vmatpush.msra.mxu0 0.0
  %529 = vmatpush.msra.mxu0 0.0
  %530 = vmatpush.msra.mxu0 0.0
  %531 = vmatpush.msra.mxu0 0.0
  %532 = vmatpush.msra.mxu0 0.0
  %533 = vmatpush.msra.mxu0 0.0
  %534 = vmatpush.msra.mxu0 0.0
  %535 = vmatpush.msra.mxu0 0.0
  %536 = vmatpush.msra.mxu0 0.0
  %537 = vmatpush.msra.mxu0 0.0
  %538 = vmatpush.msra.mxu0 0.0
  %539 = vmatpush.msra.mxu0 0.0
  %540 = vmatpush.msra.mxu0 %v515
  %541 = vmatpush.msra.mxu0 %v514
  %542 = vmatpush.msra.mxu0 %v513
  %543 = vmatpush.msra.mxu0 %v512
  %544 = vmatmul.f32.gmra.mxu0 %v517
  %v545 = vpop.f32.mrf.mxu0
  %v546 = vadd.f32 0.0, %v545
  %547 = vmatmul.f32.gmra.mxu0 %v520
  %v548 = vpop.f32.mrf.mxu0
  %v549 = vadd.f32 0.0, %v548
  %550 = vmatmul.f32.gmra.mxu0 %v523
  %v551 = vpop.f32.mrf.mxu0
  %v552 = vadd.f32 0.0, %v551
  %553 = vmatmul.f32.gmra.mxu0 %v526
  %v554 = vpop.f32.mrf.mxu0
  %v555 = vadd.f32 0.0, %v554
  %556 = vdwg.mxu0
  %v557 = vadd.f32 %v466, %v546
  %v558 = vadd.f32 %v467, %v549
  %v559 = vadd.f32 %v468, %v552
  %v560 = vadd.f32 %v469, %v555
  %561 = vmatpush.msra.mxu0 0.0
  %562 = vmatpush.msra.mxu0 0.0
  %563 = vmatpush.msra.mxu0 0.0
  %564 = vmatpush.msra.mxu0 0.0
  %565 = vmatpush.msra.mxu0 0.0
  %566 = vmatpush.msra.mxu0 0.0
  %567 = vmatpush.msra.mxu0 0.0
  %568 = vmatpush.msra.mxu0 0.0
  %569 = vmatpush.msra.mxu0 0.0
  %570 = vmatpush.msra.mxu0 0.0
  %571 = vmatpush.msra.mxu0 0.0
  %572 = vmatpush.msra.mxu0 0.0
  %573 = vmatpush.msra.mxu0 %v329
  %574 = vmatpush.msra.mxu0 %v314
  %575 = vmatpush.msra.mxu0 %v299
  %576 = vmatpush.msra.mxu0 %v284
  %577 = vmatmul.f32.gmra.mxu0 %v343
  %v578 = vpop.f32.mrf.mxu0
  %v579 = vadd.f32 0.0, %v578
  %580 = vmatmul.f32.gmra.mxu0 %v346
  %v581 = vpop.f32.mrf.mxu0
  %v582 = vadd.f32 0.0, %v581
  %583 = vmatmul.f32.gmra.mxu0 %v349
  %v584 = vpop.f32.mrf.mxu0
  %v585 = vadd.f32 0.0, %v584
  %586 = vmatmul.f32.gmra.mxu0 %v352
  %v587 = vpop.f32.mrf.mxu0
  %v588 = vadd.f32 0.0, %v587
  %589 = vdwg.mxu0
  %v590 = vld [vmem:[%s11] sm:$0xff]
  %v591 = vld [vmem:[%s11 + $0x8] sm:$0xff]
  %v592 = vld [vmem:[%s11 + $0x10] sm:$0xff]
  %v593 = vld [vmem:[%s11 + $0x18] sm:$0xff]
  %v594 = vld [vmem:[%s11 + $0x20] sm:$0xff]
  %v595 = vld [vmem:[%s11 + $0x28] sm:$0xff]
  %v596 = vld [vmem:[%s11 + $0x30] sm:$0xff]
  %v597 = vld [vmem:[%s11 + $0x38] sm:$0xff]
  %v598 = vld [vmem:[%s11 + $0x40] sm:$0xff]
  %v599 = vld [vmem:[%s11 + $0x48] sm:$0xff]
  %v600 = vld [vmem:[%s11 + $0x50] sm:$0xff]
  %v601 = vld [vmem:[%s11 + $0x58] sm:$0xff]
  %v602 = vld [vmem:[%s11 + $0x60] sm:$0xff]
  %v603 = vld [vmem:[%s11 + $0x68] sm:$0xff]
  %v604 = vld [vmem:[%s11 + $0x70] sm:$0xff]
  %v605 = vld [vmem:[%s11 + $0x78] sm:$0xff]
  %606 = vmatpush.msra.mxu0 %v605
  %607 = vmatpush.msra.mxu0 %v604
  %608 = vmatpush.msra.mxu0 %v603
  %609 = vmatpush.msra.mxu0 %v602
  %610 = vmatpush.msra.mxu0 %v601
  %611 = vmatpush.msra.mxu0 %v600
  %612 = vmatpush.msra.mxu0 %v599
  %613 = vmatpush.msra.mxu0 %v598
  %614 = vmatpush.msra.mxu0 %v597
  %615 = vmatpush.msra.mxu0 %v596
  %616 = vmatpush.msra.mxu0 %v595
  %617 = vmatpush.msra.mxu0 %v594
  %618 = vmatpush.msra.mxu0 %v593
  %619 = vmatpush.msra.mxu0 %v592
  %620 = vmatpush.msra.mxu0 %v591
  %621 = vmatpush.msra.mxu0 %v590
  %622 = vmatmul.f32.gmra.mxu0 %v579
  %v623 = vpop.f32.mrf.mxu0
  %v624 = vadd.f32 0.0, %v623
  %625 = vmatmul.f32.gmra.mxu0 %v582
  %v626 = vpop.f32.mrf.mxu0
  %v627 = vadd.f32 0.0, %v626
  %628 = vmatmul.f32.gmra.mxu0 %v585
  %v629 = vpop.f32.mrf.mxu0
  %v630 = vadd.f32 0.0, %v629
  %631 = vmatmul.f32.gmra.mxu0 %v588
  %v632 = vpop.f32.mrf.mxu0
  %v633 = vadd.f32 0.0, %v632
  %634 = vdwg.mxu0
  %v635 = vadd.f32 %v557, %v624
  %v636 = vadd.f32 %v558, %v627
  %v637 = vadd.f32 %v559, %v630
  %v638 = vadd.f32 %v560, %v633
  %s639 = scalar_lea.vmem %s11, 128
  %v640 = vld [vmem:[%s639] sm:$0xff]
  %v641 = vld [vmem:[%s639 + $0x8] sm:$0xff]
  %v642 = vld [vmem:[%s639 + $0x10] sm:$0xff]
  %v643 = vld [vmem:[%s639 + $0x18] sm:$0xff]
  %v644 = vld [vmem:[%s639 + $0x20] sm:$0xff]
  %v645 = vld [vmem:[%s639 + $0x28] sm:$0xff]
  %v646 = vld [vmem:[%s639 + $0x30] sm:$0xff]
  %v647 = vld [vmem:[%s639 + $0x38] sm:$0xff]
  %v648 = vld [vmem:[%s639 + $0x40] sm:$0xff]
  %v649 = vld [vmem:[%s639 + $0x48] sm:$0xff]
  %v650 = vld [vmem:[%s639 + $0x50] sm:$0xff]
  %v651 = vld [vmem:[%s639 + $0x58] sm:$0xff]
  %v652 = vld [vmem:[%s639 + $0x60] sm:$0xff]
  %v653 = vld [vmem:[%s639 + $0x68] sm:$0xff]
  %v654 = vld [vmem:[%s639 + $0x70] sm:$0xff]
  %v655 = vld [vmem:[%s639 + $0x78] sm:$0xff]
  %656 = vmatpush.msra.mxu0 %v655
  %657 = vmatpush.msra.mxu0 %v654
  %658 = vmatpush.msra.mxu0 %v653
  %659 = vmatpush.msra.mxu0 %v652
  %660 = vmatpush.msra.mxu0 %v651
  %661 = vmatpush.msra.mxu0 %v650
  %662 = vmatpush.msra.mxu0 %v649
  %663 = vmatpush.msra.mxu0 %v648
  %664 = vmatpush.msra.mxu0 %v647
  %665 = vmatpush.msra.mxu0 %v646
  %666 = vmatpush.msra.mxu0 %v645
  %667 = vmatpush.msra.mxu0 %v644
  %668 = vmatpush.msra.mxu0 %v643
  %669 = vmatpush.msra.mxu0 %v642
  %670 = vmatpush.msra.mxu0 %v641
  %671 = vmatpush.msra.mxu0 %v640
  %672 = vmatmul.f32.gmra.mxu0 %v284
  %v673 = vpop.f32.mrf.mxu0
  %v674 = vadd.f32 0.0, %v673
  %675 = vmatmul.f32.gmra.mxu0 %v299
  %v676 = vpop.f32.mrf.mxu0
  %v677 = vadd.f32 0.0, %v676
  %678 = vmatmul.f32.gmra.mxu0 %v314
  %v679 = vpop.f32.mrf.mxu0
  %v680 = vadd.f32 0.0, %v679
  %681 = vmatmul.f32.gmra.mxu0 %v329
  %v682 = vpop.f32.mrf.mxu0
  %v683 = vadd.f32 0.0, %v682
  %684 = vdwg.mxu0
  %v685 = vadd.f32 %v635, %v674
  %v686 = vadd.f32 %v636, %v677
  %v687 = vadd.f32 %v637, %v680
  %v688 = vadd.f32 %v638, %v683
  %689 = vmatpush.msra.mxu0 0.0
  %690 = vmatpush.msra.mxu0 0.0
  %691 = vmatpush.msra.mxu0 0.0
  %692 = vmatpush.msra.mxu0 0.0
  %693 = vmatpush.msra.mxu0 0.0
  %694 = vmatpush.msra.mxu0 0.0
  %695 = vmatpush.msra.mxu0 0.0
  %696 = vmatpush.msra.mxu0 0.0
  %697 = vmatpush.msra.mxu0 0.0
  %698 = vmatpush.msra.mxu0 0.0
  %699 = vmatpush.msra.mxu0 0.0
  %700 = vmatpush.msra.mxu0 0.0
  %701 = vmatpush.msra.mxu0 %v329
  %702 = vmatpush.msra.mxu0 %v314
  %703 = vmatpush.msra.mxu0 %v299
  %704 = vmatpush.msra.mxu0 %v284
  %705 = vmatmul.f32.gmra.mxu0 %v471
  %v706 = vpop.f32.mrf.mxu0
  %v707 = vadd.f32 0.0, %v706
  %708 = vmatmul.f32.gmra.mxu0 %v474
  %v709 = vpop.f32.mrf.mxu0
  %v710 = vadd.f32 0.0, %v709
  %711 = vmatmul.f32.gmra.mxu0 %v477
  %v712 = vpop.f32.mrf.mxu0
  %v713 = vadd.f32 0.0, %v712
  %714 = vmatmul.f32.gmra.mxu0 %v480
  %v715 = vpop.f32.mrf.mxu0
  %v716 = vadd.f32 0.0, %v715
  %717 = vdwg.mxu0
  %s718 = scalar_lea.vmem %s11, 256
  %v719 = vld [vmem:[%s718] sm:$0xff]
  %v720 = vld [vmem:[%s718 + $0x8] sm:$0xff]
  %v721 = vld [vmem:[%s718 + $0x10] sm:$0xff]
  %v722 = vld [vmem:[%s718 + $0x18] sm:$0xff]
  %v723 = vld [vmem:[%s718 + $0x20] sm:$0xff]
  %v724 = vld [vmem:[%s718 + $0x28] sm:$0xff]
  %v725 = vld [vmem:[%s718 + $0x30] sm:$0xff]
  %v726 = vld [vmem:[%s718 + $0x38] sm:$0xff]
  %v727 = vld [vmem:[%s718 + $0x40] sm:$0xff]
  %v728 = vld [vmem:[%s718 + $0x48] sm:$0xff]
  %v729 = vld [vmem:[%s718 + $0x50] sm:$0xff]
  %v730 = vld [vmem:[%s718 + $0x58] sm:$0xff]
  %v731 = vld [vmem:[%s718 + $0x60] sm:$0xff]
  %v732 = vld [vmem:[%s718 + $0x68] sm:$0xff]
  %v733 = vld [vmem:[%s718 + $0x70] sm:$0xff]
  %v734 = vld [vmem:[%s718 + $0x78] sm:$0xff]
  %735 = vmatpush.msra.mxu0 %v734
  %736 = vmatpush.msra.mxu0 %v733
  %737 = vmatpush.msra.mxu0 %v732
  %738 = vmatpush.msra.mxu0 %v731
  %739 = vmatpush.msra.mxu0 %v730
  %740 = vmatpush.msra.mxu0 %v729
  %741 = vmatpush.msra.mxu0 %v728
  %742 = vmatpush.msra.mxu0 %v727
  %743 = vmatpush.msra.mxu0 %v726
  %744 = vmatpush.msra.mxu0 %v725
  %745 = vmatpush.msra.mxu0 %v724
  %746 = vmatpush.msra.mxu0 %v723
  %747 = vmatpush.msra.mxu0 %v722
  %748 = vmatpush.msra.mxu0 %v721
  %749 = vmatpush.msra.mxu0 %v720
  %750 = vmatpush.msra.mxu0 %v719
  %751 = vmatmul.f32.gmra.mxu0 %v707
  %v752 = vpop.f32.mrf.mxu0
  %v753 = vadd.f32 0.0, %v752
  %754 = vmatmul.f32.gmra.mxu0 %v710
  %v755 = vpop.f32.mrf.mxu0
  %v756 = vadd.f32 0.0, %v755
  %757 = vmatmul.f32.gmra.mxu0 %v713
  %v758 = vpop.f32.mrf.mxu0
  %v759 = vadd.f32 0.0, %v758
  %760 = vmatmul.f32.gmra.mxu0 %v716
  %v761 = vpop.f32.mrf.mxu0
  %v762 = vadd.f32 0.0, %v761
  %763 = vdwg.mxu0
  %v764 = vadd.f32 %v685, %v753
  %v765 = vadd.f32 %v686, %v756
  %v766 = vadd.f32 %v687, %v759
  %v767 = vadd.f32 %v688, %v762
  %v768 = vmax.f32 %v764, 0.0
  %v769 = vmax.f32 %v765, 0.0
  %v770 = vmax.f32 %v766, 0.0
  %v771 = vmax.f32 %v767, 0.0
  %v772 = vld [vmem:[%s14] sm:$0x1]
  %v774 = vperm.slane %v772, 0
  %776 = vmatpush.msra.mxu0 0.0
  %777 = vmatpush.msra.mxu0 0.0
  %778 = vmatpush.msra.mxu0 0.0
  %779 = vmatpush.msra.mxu0 0.0
  %780 = vmatpush.msra.mxu0 0.0
  %781 = vmatpush.msra.mxu0 0.0
  %782 = vmatpush.msra.mxu0 0.0
  %783 = vmatpush.msra.mxu0 0.0
  %784 = vmatpush.msra.mxu0 0.0
  %785 = vmatpush.msra.mxu0 0.0
  %786 = vmatpush.msra.mxu0 0.0
  %787 = vmatpush.msra.mxu0 0.0
  %788 = vmatpush.msra.mxu0 %v771
  %789 = vmatpush.msra.mxu0 %v770
  %790 = vmatpush.msra.mxu0 %v769
  %791 = vmatpush.msra.mxu0 %v768
  %792 = vmatmul.f32.gmra.mxu0 %v343
  %v793 = vpop.f32.mrf.mxu0
  %v794 = vadd.f32 0.0, %v793
  %795 = vmatmul.f32.gmra.mxu0 %v346
  %v796 = vpop.f32.mrf.mxu0
  %v797 = vadd.f32 0.0, %v796
  %798 = vmatmul.f32.gmra.mxu0 %v349
  %v799 = vpop.f32.mrf.mxu0
  %v800 = vadd.f32 0.0, %v799
  %801 = vmatmul.f32.gmra.mxu0 %v352
  %v802 = vpop.f32.mrf.mxu0
  %v803 = vadd.f32 0.0, %v802
  %804 = vdwg.mxu0
  %v805 = vld [vmem:[%s13] sm:$0xff]
  %v806 = vld [vmem:[%s13 + $0x8] sm:$0xff]
  %v807 = vld [vmem:[%s13 + $0x10] sm:$0xff]
  %v808 = vld [vmem:[%s13 + $0x18] sm:$0xff]
  %v809 = vld [vmem:[%s13 + $0x20] sm:$0xff]
  %v810 = vld [vmem:[%s13 + $0x28] sm:$0xff]
  %v811 = vld [vmem:[%s13 + $0x30] sm:$0xff]
  %v812 = vld [vmem:[%s13 + $0x38] sm:$0xff]
  %v813 = vld [vmem:[%s13 + $0x40] sm:$0xff]
  %v814 = vld [vmem:[%s13 + $0x48] sm:$0xff]
  %v815 = vld [vmem:[%s13 + $0x50] sm:$0xff]
  %v816 = vld [vmem:[%s13 + $0x58] sm:$0xff]
  %v817 = vld [vmem:[%s13 + $0x60] sm:$0xff]
  %v818 = vld [vmem:[%s13 + $0x68] sm:$0xff]
  %v819 = vld [vmem:[%s13 + $0x70] sm:$0xff]
  %v820 = vld [vmem:[%s13 + $0x78] sm:$0xff]
  %821 = vmatpush.msra.mxu0 %v820
  %822 = vmatpush.msra.mxu0 %v819
  %823 = vmatpush.msra.mxu0 %v818
  %824 = vmatpush.msra.mxu0 %v817
  %825 = vmatpush.msra.mxu0 %v816
  %826 = vmatpush.msra.mxu0 %v815
  %827 = vmatpush.msra.mxu0 %v814
  %828 = vmatpush.msra.mxu0 %v813
  %829 = vmatpush.msra.mxu0 %v812
  %830 = vmatpush.msra.mxu0 %v811
  %831 = vmatpush.msra.mxu0 %v810
  %832 = vmatpush.msra.mxu0 %v809
  %833 = vmatpush.msra.mxu0 %v808
  %834 = vmatpush.msra.mxu0 %v807
  %835 = vmatpush.msra.mxu0 %v806
  %836 = vmatpush.msra.mxu0 %v805
  %837 = vmatmul.f32.gmra.mxu0 %v794
  %v838 = vpop.f32.mrf.mxu0
  %v839 = vadd.f32 0.0, %v838
  %840 = vmatmul.f32.gmra.mxu0 %v797
  %v841 = vpop.f32.mrf.mxu0
  %v842 = vadd.f32 0.0, %v841
  %843 = vmatmul.f32.gmra.mxu0 %v800
  %v844 = vpop.f32.mrf.mxu0
  %v845 = vadd.f32 0.0, %v844
  %846 = vmatmul.f32.gmra.mxu0 %v803
  %v847 = vpop.f32.mrf.mxu0
  %v848 = vadd.f32 0.0, %v847
  %849 = vdwg.mxu0
  %v850 = vadd.f32 %v774, %v839
  %v851 = vadd.f32 %v774, %v842
  %v852 = vadd.f32 %v774, %v845
  %v853 = vadd.f32 %v774, %v848
  %s854 = scalar_lea.vmem %s13, 128
  %v855 = vld [vmem:[%s854] sm:$0xff]
  %v856 = vld [vmem:[%s854 + $0x8] sm:$0xff]
  %v857 = vld [vmem:[%s854 + $0x10] sm:$0xff]
  %v858 = vld [vmem:[%s854 + $0x18] sm:$0xff]
  %v859 = vld [vmem:[%s854 + $0x20] sm:$0xff]
  %v860 = vld [vmem:[%s854 + $0x28] sm:$0xff]
  %v861 = vld [vmem:[%s854 + $0x30] sm:$0xff]
  %v862 = vld [vmem:[%s854 + $0x38] sm:$0xff]
  %v863 = vld [vmem:[%s854 + $0x40] sm:$0xff]
  %v864 = vld [vmem:[%s854 + $0x48] sm:$0xff]
  %v865 = vld [vmem:[%s854 + $0x50] sm:$0xff]
  %v866 = vld [vmem:[%s854 + $0x58] sm:$0xff]
  %v867 = vld [vmem:[%s854 + $0x60] sm:$0xff]
  %v868 = vld [vmem:[%s854 + $0x68] sm:$0xff]
  %v869 = vld [vmem:[%s854 + $0x70] sm:$0xff]
  %v870 = vld [vmem:[%s854 + $0x78] sm:$0xff]
  %871 = vmatpush.msra.mxu0 %v870
  %872 = vmatpush.msra.mxu0 %v869
  %873 = vmatpush.msra.mxu0 %v868
  %874 = vmatpush.msra.mxu0 %v867
  %875 = vmatpush.msra.mxu0 %v866
  %876 = vmatpush.msra.mxu0 %v865
  %877 = vmatpush.msra.mxu0 %v864
  %878 = vmatpush.msra.mxu0 %v863
  %879 = vmatpush.msra.mxu0 %v862
  %880 = vmatpush.msra.mxu0 %v861
  %881 = vmatpush.msra.mxu0 %v860
  %882 = vmatpush.msra.mxu0 %v859
  %883 = vmatpush.msra.mxu0 %v858
  %884 = vmatpush.msra.mxu0 %v857
  %885 = vmatpush.msra.mxu0 %v856
  %886 = vmatpush.msra.mxu0 %v855
  %887 = vmatmul.f32.gmra.mxu0 %v768
  %v888 = vpop.f32.mrf.mxu0
  %v889 = vadd.f32 0.0, %v888
  %890 = vmatmul.f32.gmra.mxu0 %v769
  %v891 = vpop.f32.mrf.mxu0
  %v892 = vadd.f32 0.0, %v891
  %893 = vmatmul.f32.gmra.mxu0 %v770
  %v894 = vpop.f32.mrf.mxu0
  %v895 = vadd.f32 0.0, %v894
  %896 = vmatmul.f32.gmra.mxu0 %v771
  %v897 = vpop.f32.mrf.mxu0
  %v898 = vadd.f32 0.0, %v897
  %899 = vdwg.mxu0
  %v900 = vadd.f32 %v850, %v889
  %v901 = vadd.f32 %v851, %v892
  %v902 = vadd.f32 %v852, %v895
  %v903 = vadd.f32 %v853, %v898
  %904 = vmatpush.msra.mxu0 0.0
  %905 = vmatpush.msra.mxu0 0.0
  %906 = vmatpush.msra.mxu0 0.0
  %907 = vmatpush.msra.mxu0 0.0
  %908 = vmatpush.msra.mxu0 0.0
  %909 = vmatpush.msra.mxu0 0.0
  %910 = vmatpush.msra.mxu0 0.0
  %911 = vmatpush.msra.mxu0 0.0
  %912 = vmatpush.msra.mxu0 0.0
  %913 = vmatpush.msra.mxu0 0.0
  %914 = vmatpush.msra.mxu0 0.0
  %915 = vmatpush.msra.mxu0 0.0
  %916 = vmatpush.msra.mxu0 %v771
  %917 = vmatpush.msra.mxu0 %v770
  %918 = vmatpush.msra.mxu0 %v769
  %919 = vmatpush.msra.mxu0 %v768
  %920 = vmatmul.f32.gmra.mxu0 %v471
  %v921 = vpop.f32.mrf.mxu0
  %v922 = vadd.f32 0.0, %v921
  %923 = vmatmul.f32.gmra.mxu0 %v474
  %v924 = vpop.f32.mrf.mxu0
  %v925 = vadd.f32 0.0, %v924
  %926 = vmatmul.f32.gmra.mxu0 %v477
  %v927 = vpop.f32.mrf.mxu0
  %v928 = vadd.f32 0.0, %v927
  %929 = vmatmul.f32.gmra.mxu0 %v480
  %v930 = vpop.f32.mrf.mxu0
  %v931 = vadd.f32 0.0, %v930
  %932 = vdwg.mxu0
  %s933 = scalar_lea.vmem %s13, 256
  %v934 = vld [vmem:[%s933] sm:$0xff]
  %v935 = vld [vmem:[%s933 + $0x8] sm:$0xff]
  %v936 = vld [vmem:[%s933 + $0x10] sm:$0xff]
  %v937 = vld [vmem:[%s933 + $0x18] sm:$0xff]
  %v938 = vld [vmem:[%s933 + $0x20] sm:$0xff]
  %v939 = vld [vmem:[%s933 + $0x28] sm:$0xff]
  %v940 = vld [vmem:[%s933 + $0x30] sm:$0xff]
  %v941 = vld [vmem:[%s933 + $0x38] sm:$0xff]
  %v942 = vld [vmem:[%s933 + $0x40] sm:$0xff]
  %v943 = vld [vmem:[%s933 + $0x48] sm:$0xff]
  %v944 = vld [vmem:[%s933 + $0x50] sm:$0xff]
  %v945 = vld [vmem:[%s933 + $0x58] sm:$0xff]
  %v946 = vld [vmem:[%s933 + $0x60] sm:$0xff]
  %v947 = vld [vmem:[%s933 + $0x68] sm:$0xff]
  %v948 = vld [vmem:[%s933 + $0x70] sm:$0xff]
  %v949 = vld [vmem:[%s933 + $0x78] sm:$0xff]
  %950 = vmatpush.msra.mxu0 %v949
  %951 = vmatpush.msra.mxu0 %v948
  %952 = vmatpush.msra.mxu0 %v947
  %953 = vmatpush.msra.mxu0 %v946
  %954 = vmatpush.msra.mxu0 %v945
  %955 = vmatpush.msra.mxu0 %v944
  %956 = vmatpush.msra.mxu0 %v943
  %957 = vmatpush.msra.mxu0 %v942
  %958 = vmatpush.msra.mxu0 %v941
  %959 = vmatpush.msra.mxu0 %v940
  %960 = vmatpush.msra.mxu0 %v939
  %961 = vmatpush.msra.mxu0 %v938
  %962 = vmatpush.msra.mxu0 %v937
  %963 = vmatpush.msra.mxu0 %v936
  %964 = vmatpush.msra.mxu0 %v935
  %965 = vmatpush.msra.mxu0 %v934
  %966 = vmatmul.f32.gmra.mxu0 %v922
  %v967 = vpop.f32.mrf.mxu0
  %v968 = vadd.f32 0.0, %v967
  %969 = vmatmul.f32.gmra.mxu0 %v925
  %v970 = vpop.f32.mrf.mxu0
  %v971 = vadd.f32 0.0, %v970
  %972 = vmatmul.f32.gmra.mxu0 %v928
  %v973 = vpop.f32.mrf.mxu0
  %v974 = vadd.f32 0.0, %v973
  %975 = vmatmul.f32.gmra.mxu0 %v931
  %v976 = vpop.f32.mrf.mxu0
  %v977 = vadd.f32 0.0, %v976
  %978 = vdwg.mxu0
  %v979 = vadd.f32 %v900, %v968
  %v980 = vadd.f32 %v901, %v971
  %v981 = vadd.f32 %v902, %v974
  %v982 = vadd.f32 %v903, %v977
  %v983 = vmax.f32 %v979, 0.0
  %v984 = vmax.f32 %v980, 0.0
  %v985 = vmax.f32 %v981, 0.0
  %v986 = vmax.f32 %v982, 0.0
  %987 = vst [vmem:[%s15] sm:$0xff] %v983
  %988 = vst [vmem:[%s15 + $0x8] sm:$0xff] %v984
  %989 = vst [vmem:[%s15 + $0x10] sm:$0xff] %v985
  %990 = vst [vmem:[%s15 + $0x18] sm:$0xff] %v986
  // Predicated region
  $region62: #{decoder_block_forward.1} parent=0 // pred_check
    _
  $region63: #{decoder_block_forward.1} parent=0 // pred_check_branch
    %992 = sbr.rel (0) target = $region65
  $region64: #{decoder_block_forward.1} parent=0 // pred_region
    _
  $region65: #{decoder_block_forward.1} parent=0 // pred_fallthru
    _
  // Predicated region
  $region66: #{decoder_block_forward.1} parent=0 // pred_check
    _
  $region67: #{decoder_block_forward.1} parent=0 // pred_check_branch
    %994 = sbr.rel (0) target = $region69
  $region68: #{decoder_block_forward.1} parent=0 // pred_region
    _
  $region69: #{decoder_block_forward.1} parent=0 // pred_fallthru
    _

</llo_original>
